<compile_context>
chip_gen: v5e
topology: v5e:2x2
jax: 0.10.0
libtpu: 0.0.40
codegen_flags: <defaults>
</compile_context>

<pallas_src>
import jax
import jax.numpy as jnp
from jax.experimental import pallas as pl
from jax.experimental.pallas import tpu as pltpu

# ----------------------- small BERT config -----------------------
B, S, H = 2, 8, 32          # batch, seq, hidden  (args.bert_hidden_size = 32)
NH, DH = 4, 8               # heads, head dim
I = 64                      # intermediate (FFN) size
L = 2                       # encoder layers
VOCAB, TYPE_VOCAB, MAX_POS = 64, 2, 16
NCLASSES = 3                # args.nclasses ('dil' scenario -> single Linear head)
LN_EPS = 1e-12
PAD = 128                   # lane-dense padding for pooler / classifier outputs
CROSS_MASK = -1e9           # additive bias on cross-batch key blocks (exp -> exactly 0)

# packed "vecs" slab row layout (each row is one bias / LN vector, padded to 128 lanes)
ROW_EMB_LN_G, ROW_EMB_LN_B, ROW_POOL_B, ROW_LAST_B = 0, 1, 2, 3
ROW_LAYER0, ROWS_PER_LAYER = 4, 8        # per layer: qkv_b, ao_b, ln1_g, ln1_b, i_b, o_b, ln2_g, ln2_b
NVEC = ROW_LAYER0 + ROWS_PER_LAYER * L   # 20

_VMEM = pl.BlockSpec(memory_space=pltpu.MemorySpace.VMEM)


# ----------------------- fused forward kernel -----------------------
def _layernorm(x, g, b):
    mean = jnp.mean(x, axis=-1, keepdims=True)
    var = jnp.mean(jnp.square(x - mean), axis=-1, keepdims=True)
    return (x - mean) * jax.lax.rsqrt(var + LN_EPS) * g + b


def _gelu(x):                       # exact (erf) GELU, BERT default
    return 0.5 * x * (1.0 + jax.lax.erf(x * 0.7071067811865476))


def _bert_fused_kernel(emb_ref, mask_ref, vecs_ref,
                       qkv_w_ref, ao_w_ref, i_w_ref, o_w_ref,
                       pool_w_ref, last_w_ref,
                       out_ref):
    def vrow(r, w):                 # (1, w) bias / LN row from the packed vecs slab
        return vecs_ref[r:r + 1, :w]

    # embeddings: sum came in precomputed; LayerNorm here.
    x = _layernorm(emb_ref[...], vrow(ROW_EMB_LN_G, H), vrow(ROW_EMB_LN_B, H))   # (B*S, H)
    mask = mask_ref[...]            # (B*S, B*S) full additive mask, hoisted out of all loops

    for l in range(L):              # static unroll (L=2)
        base = ROW_LAYER0 + l * ROWS_PER_LAYER

        # fused QKV projection: one (B*S, H) @ (H, 3H) matmul; 1/sqrt(DH) folded into Q weights.
        qkv = jnp.dot(x, qkv_w_ref[l], preferred_element_type=jnp.float32) + vrow(base + 0, 3 * H)

        # multi-head attention, batched over the batch dim per head (cross-batch blocks masked).
        ctx_heads = []
        for h in range(NH):
            c0 = h * DH
            q_h = qkv[:, c0:c0 + DH]                   # (B*S, DH)
            k_h = qkv[:, H + c0:H + c0 + DH]
            v_h = qkv[:, 2 * H + c0:2 * H + c0 + DH]
            s = jnp.dot(q_h, k_h.T, preferred_element_type=jnp.float32) + mask   # (B*S, B*S)
            s = s - jnp.max(s, axis=-1, keepdims=True)
            p = jnp.exp(s)
            p = p / jnp.sum(p, axis=-1, keepdims=True)                           # exact softmax
            ctx_heads.append(jnp.dot(p, v_h, preferred_element_type=jnp.float32))
        ctx = jnp.concatenate(ctx_heads, axis=-1)      # (B*S, H) — no VMEM scratch round-trip

        attn_out = jnp.dot(ctx, ao_w_ref[l], preferred_element_type=jnp.float32) + vrow(base + 1, H)
        x = _layernorm(attn_out + x, vrow(base + 2, H), vrow(base + 3, H))

        inter = _gelu(jnp.dot(x, i_w_ref[l], preferred_element_type=jnp.float32) + vrow(base + 4, I))
        ffn_out = jnp.dot(inter, o_w_ref[l], preferred_element_type=jnp.float32) + vrow(base + 5, H)
        x = _layernorm(ffn_out + x, vrow(base + 6, H), vrow(base + 7, H))

    # --- pooler over [CLS] tokens (rows b*S), lane-dense padded weights ---
    cls = jnp.concatenate([x[b * S:b * S + 1, :] for b in range(B)], axis=0)      # (B, H)
    pooled = jnp.tanh(jnp.dot(cls, pool_w_ref[...], preferred_element_type=jnp.float32)
                      + vrow(ROW_POOL_B, PAD))                                    # (B, PAD)

    # classifier head (columns >= NCLASSES are zero by construction)
    y = jnp.dot(pooled, last_w_ref[...], preferred_element_type=jnp.float32) + vrow(ROW_LAST_B, PAD)

    # F.normalize(dim=1): x / max(||x||, 1e-12)  (padding lanes are exactly 0)
    sumsq = jnp.sum(pooled * pooled, axis=-1, keepdims=True)
    normed = pooled * jax.lax.rsqrt(jnp.maximum(sumsq, 1e-24))

    # single lane-dense (B, 256) output slab, written as two 128-aligned stores
    out_ref[:, :PAD] = y
    out_ref[:, PAD:2 * PAD] = normed


_bert_forward_call = pl.pallas_call(
    _bert_fused_kernel,
    out_shape=jax.ShapeDtypeStruct((B, 2 * PAD), jnp.float32),
    in_specs=[_VMEM] * 9,
    out_specs=_VMEM,
)


# ----------------------- parameters -----------------------
def init_params(key):
    keys = iter(jax.random.split(key, 16))

    def nrm(shape):
        return (0.02 * jax.random.normal(next(keys), shape)).astype(jnp.float32)

    def pad_row(v, w=PAD):
        v = jnp.asarray(v, jnp.float32).reshape(-1)
        return jnp.zeros((w,), jnp.float32).at[:v.shape[0]].set(v)

    word = nrm((VOCAB, H))
    pos = nrm((MAX_POS, H))
    typ = nrm((TYPE_VOCAB, H))

    scale = 1.0 / float(DH) ** 0.5

    qkv_w, ao_w, i_w, o_w = [], [], [], []
    vec_rows = [
        pad_row(jnp.ones((H,))),      # emb_ln_g
        pad_row(jnp.zeros((H,))),     # emb_ln_b
        pad_row(jnp.zeros((PAD,))),   # pool_b (padded lanes stay 0)
        pad_row(jnp.zeros((PAD,))),   # last_b
    ]
    for _ in range(L):
        qw = nrm((H, 3 * H))
        qw = qw.at[:, :H].multiply(scale)              # fold 1/sqrt(DH) into Q columns
        qkv_w.append(qw)
        ao_w.append(nrm((H, H)))
        i_w.append(nrm((H, I)))
        o_w.append(nrm((I, H)))
        qkv_b = jnp.zeros((3 * H,), jnp.float32)
        qkv_b = qkv_b.at[:H].multiply(scale)           # (zeros; kept for generality)
        vec_rows += [
            pad_row(qkv_b),                # qkv_b
            pad_row(jnp.zeros((H,))),      # ao_b
            pad_row(jnp.ones((H,))),       # ln1_g
            pad_row(jnp.zeros((H,))),      # ln1_b
            pad_row(jnp.zeros((I,))),      # i_b
            pad_row(jnp.zeros((H,))),      # o_b
            pad_row(jnp.ones((H,))),       # ln2_g
            pad_row(jnp.zeros((H,))),      # ln2_b
        ]

    pool_w = nrm((H, H))
    last_w = nrm((H, NCLASSES))
    # lane-dense padding: extra columns/rows are zero, so padded lanes stay exactly 0.
    pool_w_pad = jnp.zeros((H, PAD), jnp.float32).at[:, :H].set(pool_w)
    last_w_pad = jnp.zeros((PAD, PAD), jnp.float32).at[:H, :NCLASSES].set(last_w)

    return {
        "word_emb": word, "pos_emb": pos, "type_emb": typ,
        "vecs": jnp.stack(vec_rows),                  # (NVEC, 128)
        "qkv_w": jnp.stack(qkv_w),                    # (L, H, 3H)
        "ao_w": jnp.stack(ao_w),                      # (L, H, H)
        "i_w": jnp.stack(i_w),                        # (L, H, I)
        "o_w": jnp.stack(o_w),                        # (L, I, H)
        "pool_w": pool_w_pad,                         # (H, PAD)
        "last_w": last_w_pad,                         # (PAD, PAD)
    }


# ----------------------- forward (Net.forward) -----------------------
@jax.jit
def net_forward(params, input_ids, segment_ids, input_mask):
    # embedding gathers are plain-JAX glue (one XLA program with the fused kernel)
    word = params["word_emb"][input_ids]                               # (B,S,H)
    pos = params["pos_emb"][:S][None, :, :]                            # (1,S,H)
    typ = params["type_emb"][segment_ids]                              # (B,S,H)
    emb = (word + pos + typ).reshape(B * S, H)

    # full (B*S, B*S) additive mask: key padding bias on same-batch blocks,
    # large negative bias on cross-batch blocks (exp underflows to exactly 0).
    ext = (1.0 - input_mask.astype(jnp.float32)) * -10000.0            # (B, S)
    key_bias = ext.reshape(1, B * S)
    batch_of = jnp.arange(B * S) // S
    same = batch_of[:, None] == batch_of[None, :]
    full_mask = jnp.where(same, key_bias, CROSS_MASK)                  # (B*S, B*S)

    slab = _bert_forward_call(
        emb, full_mask, params["vecs"],
        params["qkv_w"], params["ao_w"], params["i_w"], params["o_w"],
        params["pool_w"], params["last_w"],
    )

    # TODO(synk): train-mode dropout (args.hidden_dropout_prob) not applied; inference semantics only.
    return {
        "y": slab[:, :NCLASSES],                          # (B, NCLASSES)
        "normalized_pooled_rep": slab[:, PAD:PAD + H],    # (B, H)
    }


# ----------------------- main -----------------------
if __name__ == "__main__":
    root = jax.random.PRNGKey(0)
    k_par, k_ids, k_seg = jax.random.split(root, 3)

    params = init_params(k_par)
    input_ids = jax.random.randint(k_ids, (B, S), 0, VOCAB, dtype=jnp.int32)
    segment_ids = jax.random.randint(k_seg, (B, S), 0, TYPE_VOCAB, dtype=jnp.int32)
    input_mask = jnp.ones((B, S), jnp.int32).at[1, S - 2:].set(0)      # pad tail of batch 1

    out = net_forward(params, input_ids, segment_ids, input_mask)
    jax.block_until_ready(out)

    assert out["y"].shape == (B, NCLASSES)
    assert out["normalized_pooled_rep"].shape == (B, H)
    print("KERNEL_OK")
</pallas_src>

<mosaic_0001>
module attributes {stable_mosaic.version = 11 : i64} {
  func.func @_bert_fused_kernel(%arg0: memref<16x32xf32, #tpu.memory_space<vmem>>, %arg1: memref<16x16xf32, #tpu.memory_space<vmem>>, %arg2: memref<20x128xf32, #tpu.memory_space<vmem>>, %arg3: memref<2x32x96xf32, #tpu.memory_space<vmem>>, %arg4: memref<2x32x32xf32, #tpu.memory_space<vmem>>, %arg5: memref<2x32x64xf32, #tpu.memory_space<vmem>>, %arg6: memref<2x64x32xf32, #tpu.memory_space<vmem>>, %arg7: memref<32x128xf32, #tpu.memory_space<vmem>>, %arg8: memref<128x128xf32, #tpu.memory_space<vmem>>, %arg9: memref<2x256xf32, #tpu.memory_space<vmem>>) attributes {dimension_semantics = [], scalar_prefetch = 0 : i64, scratch_operands = 0 : i64, tpu.core_type = #tpu.core_type<tc>} {
    %c0 = arith.constant 0 : index
    %c0_0 = arith.constant 0 : index
    %0 = vector.load %arg0[%c0, %c0_0] : memref<16x32xf32, #tpu.memory_space<vmem>>, vector<16x32xf32>
    %c0_1 = arith.constant 0 : index
    %c0_2 = arith.constant 0 : index
    %1 = vector.load %arg2[%c0_1, %c0_2] : memref<20x128xf32, #tpu.memory_space<vmem>>, vector<1x32xf32>
    %c1 = arith.constant 1 : index
    %c0_3 = arith.constant 0 : index
    %2 = vector.load %arg2[%c1, %c0_3] : memref<20x128xf32, #tpu.memory_space<vmem>>, vector<1x32xf32>
    %cst = arith.constant dense<0.000000e+00> : vector<16xf32>
    %3 = vector.multi_reduction <add>, %0, %cst [1] : vector<16x32xf32> to vector<16xf32>
    %4 = vector.shape_cast %3 : vector<16xf32> to vector<16x1xf32>
    %cst_4 = arith.constant 3.200000e+01 : f32
    %5 = vector.broadcast %cst_4 : f32 to vector<16x1xf32>
    %6 = arith.divf %4, %5 : vector<16x1xf32>
    %7 = vector.broadcast %6 : vector<16x1xf32> to vector<16x32xf32>
    %8 = arith.subf %0, %7 : vector<16x32xf32>
    %9 = arith.mulf %8, %8 : vector<16x32xf32>
    %cst_5 = arith.constant dense<0.000000e+00> : vector<16xf32>
    %10 = vector.multi_reduction <add>, %9, %cst_5 [1] : vector<16x32xf32> to vector<16xf32>
    %11 = vector.shape_cast %10 : vector<16xf32> to vector<16x1xf32>
    %cst_6 = arith.constant 3.200000e+01 : f32
    %12 = vector.broadcast %cst_6 : f32 to vector<16x1xf32>
    %13 = arith.divf %11, %12 : vector<16x1xf32>
    %14 = vector.broadcast %6 : vector<16x1xf32> to vector<16x32xf32>
    %15 = arith.subf %0, %14 : vector<16x32xf32>
    %cst_7 = arith.constant 9.99999996E-13 : f32
    %16 = vector.broadcast %cst_7 : f32 to vector<16x1xf32>
    %17 = arith.addf %13, %16 : vector<16x1xf32>
    %18 = math.rsqrt %17 : vector<16x1xf32>
    %19 = vector.broadcast %18 : vector<16x1xf32> to vector<16x32xf32>
    %20 = arith.mulf %15, %19 : vector<16x32xf32>
    %21 = vector.broadcast %1 : vector<1x32xf32> to vector<16x32xf32>
    %22 = arith.mulf %20, %21 : vector<16x32xf32>
    %23 = vector.broadcast %2 : vector<1x32xf32> to vector<16x32xf32>
    %24 = arith.addf %22, %23 : vector<16x32xf32>
    %c0_8 = arith.constant 0 : index
    %c0_9 = arith.constant 0 : index
    %25 = vector.load %arg1[%c0_8, %c0_9] : memref<16x16xf32, #tpu.memory_space<vmem>>, vector<16x16xf32>
    %c0_10 = arith.constant 0 : index
    %c0_11 = arith.constant 0 : index
    %c0_12 = arith.constant 0 : index
    %26 = vector.load %arg3[%c0_10, %c0_11, %c0_12] : memref<2x32x96xf32, #tpu.memory_space<vmem>>, vector<1x32x96xf32>
    %27 = vector.shape_cast %26 : vector<1x32x96xf32> to vector<32x96xf32>
    %cst_13 = arith.constant dense<0.000000e+00> : vector<16x96xf32>
    %28 = tpu.matmul %24, %27, %cst_13 {dimension_numbers = #tpu.dot_dimension_numbers<[1], [0], [0], [1], [0, 0, 1, 1], [], []>} : vector<16x32xf32>, vector<32x96xf32>, vector<16x96xf32> -> vector<16x96xf32>
    %c4 = arith.constant 4 : index
    %c0_14 = arith.constant 0 : index
    %29 = vector.load %arg2[%c4, %c0_14] : memref<20x128xf32, #tpu.memory_space<vmem>>, vector<1x96xf32>
    %30 = vector.broadcast %29 : vector<1x96xf32> to vector<16x96xf32>
    %31 = arith.addf %28, %30 : vector<16x96xf32>
    %32 = vector.extract_strided_slice %31 {offsets = [0, 0], sizes = [16, 8], strides = [1, 1]} : vector<16x96xf32> to vector<16x8xf32>
    %33 = vector.extract_strided_slice %31 {offsets = [0, 32], sizes = [16, 8], strides = [1, 1]} : vector<16x96xf32> to vector<16x8xf32>
    %34 = vector.extract_strided_slice %31 {offsets = [0, 64], sizes = [16, 8], strides = [1, 1]} : vector<16x96xf32> to vector<16x8xf32>
    %35 = tpu.transpose %33, [1, 0] : vector<16x8xf32> -> vector<8x16xf32>
    %cst_15 = arith.constant dense<0.000000e+00> : vector<16x16xf32>
    %36 = tpu.matmul %32, %35, %cst_15 {dimension_numbers = #tpu.dot_dimension_numbers<[1], [0], [0], [1], [0, 0, 1, 1], [], []>} : vector<16x8xf32>, vector<8x16xf32>, vector<16x16xf32> -> vector<16x16xf32>
    %37 = arith.addf %36, %25 : vector<16x16xf32>
    %cst_16 = arith.constant dense<0xFF800000> : vector<16xf32>
    %38 = vector.multi_reduction <maximumf>, %37, %cst_16 [1] : vector<16x16xf32> to vector<16xf32>
    %39 = vector.shape_cast %38 : vector<16xf32> to vector<16x1xf32>
    %40 = vector.broadcast %39 : vector<16x1xf32> to vector<16x16xf32>
    %41 = arith.subf %37, %40 : vector<16x16xf32>
    %42 = math.exp %41 : vector<16x16xf32>
    %cst_17 = arith.constant dense<0.000000e+00> : vector<16xf32>
    %43 = vector.multi_reduction <add>, %42, %cst_17 [1] : vector<16x16xf32> to vector<16xf32>
    %44 = vector.shape_cast %43 : vector<16xf32> to vector<16x1xf32>
    %45 = vector.broadcast %44 : vector<16x1xf32> to vector<16x16xf32>
    %46 = arith.divf %42, %45 : vector<16x16xf32>
    %cst_18 = arith.constant dense<0.000000e+00> : vector<16x8xf32>
    %47 = tpu.matmul %46, %34, %cst_18 {dimension_numbers = #tpu.dot_dimension_numbers<[1], [0], [0], [1], [0, 0, 1, 1], [], []>} : vector<16x16xf32>, vector<16x8xf32>, vector<16x8xf32> -> vector<16x8xf32>
    %48 = vector.extract_strided_slice %31 {offsets = [0, 8], sizes = [16, 8], strides = [1, 1]} : vector<16x96xf32> to vector<16x8xf32>
    %49 = vector.extract_strided_slice %31 {offsets = [0, 40], sizes = [16, 8], strides = [1, 1]} : vector<16x96xf32> to vector<16x8xf32>
    %50 = vector.extract_strided_slice %31 {offsets = [0, 72], sizes = [16, 8], strides = [1, 1]} : vector<16x96xf32> to vector<16x8xf32>
    %51 = tpu.transpose %49, [1, 0] : vector<16x8xf32> -> vector<8x16xf32>
    %cst_19 = arith.constant dense<0.000000e+00> : vector<16x16xf32>
    %52 = tpu.matmul %48, %51, %cst_19 {dimension_numbers = #tpu.dot_dimension_numbers<[1], [0], [0], [1], [0, 0, 1, 1], [], []>} : vector<16x8xf32>, vector<8x16xf32>, vector<16x16xf32> -> vector<16x16xf32>
    %53 = arith.addf %52, %25 : vector<16x16xf32>
    %cst_20 = arith.constant dense<0xFF800000> : vector<16xf32>
    %54 = vector.multi_reduction <maximumf>, %53, %cst_20 [1] : vector<16x16xf32> to vector<16xf32>
    %55 = vector.shape_cast %54 : vector<16xf32> to vector<16x1xf32>
    %56 = vector.broadcast %55 : vector<16x1xf32> to vector<16x16xf32>
    %57 = arith.subf %53, %56 : vector<16x16xf32>
    %58 = math.exp %57 : vector<16x16xf32>
    %cst_21 = arith.constant dense<0.000000e+00> : vector<16xf32>
    %59 = vector.multi_reduction <add>, %58, %cst_21 [1] : vector<16x16xf32> to vector<16xf32>
    %60 = vector.shape_cast %59 : vector<16xf32> to vector<16x1xf32>
    %61 = vector.broadcast %60 : vector<16x1xf32> to vector<16x16xf32>
    %62 = arith.divf %58, %61 : vector<16x16xf32>
    %cst_22 = arith.constant dense<0.000000e+00> : vector<16x8xf32>
    %63 = tpu.matmul %62, %50, %cst_22 {dimension_numbers = #tpu.dot_dimension_numbers<[1], [0], [0], [1], [0, 0, 1, 1], [], []>} : vector<16x16xf32>, vector<16x8xf32>, vector<16x8xf32> -> vector<16x8xf32>
    %64 = vector.extract_strided_slice %31 {offsets = [0, 16], sizes = [16, 8], strides = [1, 1]} : vector<16x96xf32> to vector<16x8xf32>
    %65 = vector.extract_strided_slice %31 {offsets = [0, 48], sizes = [16, 8], strides = [1, 1]} : vector<16x96xf32> to vector<16x8xf32>
    %66 = vector.extract_strided_slice %31 {offsets = [0, 80], sizes = [16, 8], strides = [1, 1]} : vector<16x96xf32> to vector<16x8xf32>
    %67 = tpu.transpose %65, [1, 0] : vector<16x8xf32> -> vector<8x16xf32>
    %cst_23 = arith.constant dense<0.000000e+00> : vector<16x16xf32>
    %68 = tpu.matmul %64, %67, %cst_23 {dimension_numbers = #tpu.dot_dimension_numbers<[1], [0], [0], [1], [0, 0, 1, 1], [], []>} : vector<16x8xf32>, vector<8x16xf32>, vector<16x16xf32> -> vector<16x16xf32>
    %69 = arith.addf %68, %25 : vector<16x16xf32>
    %cst_24 = arith.constant dense<0xFF800000> : vector<16xf32>
    %70 = vector.multi_reduction <maximumf>, %69, %cst_24 [1] : vector<16x16xf32> to vector<16xf32>
    %71 = vector.shape_cast %70 : vector<16xf32> to vector<16x1xf32>
    %72 = vector.broadcast %71 : vector<16x1xf32> to vector<16x16xf32>
    %73 = arith.subf %69, %72 : vector<16x16xf32>
    %74 = math.exp %73 : vector<16x16xf32>
    %cst_25 = arith.constant dense<0.000000e+00> : vector<16xf32>
    %75 = vector.multi_reduction <add>, %74, %cst_25 [1] : vector<16x16xf32> to vector<16xf32>
    %76 = vector.shape_cast %75 : vector<16xf32> to vector<16x1xf32>
    %77 = vector.broadcast %76 : vector<16x1xf32> to vector<16x16xf32>
    %78 = arith.divf %74, %77 : vector<16x16xf32>
    %cst_26 = arith.constant dense<0.000000e+00> : vector<16x8xf32>
    %79 = tpu.matmul %78, %66, %cst_26 {dimension_numbers = #tpu.dot_dimension_numbers<[1], [0], [0], [1], [0, 0, 1, 1], [], []>} : vector<16x16xf32>, vector<16x8xf32>, vector<16x8xf32> -> vector<16x8xf32>
    %80 = vector.extract_strided_slice %31 {offsets = [0, 24], sizes = [16, 8], strides = [1, 1]} : vector<16x96xf32> to vector<16x8xf32>
    %81 = vector.extract_strided_slice %31 {offsets = [0, 56], sizes = [16, 8], strides = [1, 1]} : vector<16x96xf32> to vector<16x8xf32>
    %82 = vector.extract_strided_slice %31 {offsets = [0, 88], sizes = [16, 8], strides = [1, 1]} : vector<16x96xf32> to vector<16x8xf32>
    %83 = tpu.transpose %81, [1, 0] : vector<16x8xf32> -> vector<8x16xf32>
    %cst_27 = arith.constant dense<0.000000e+00> : vector<16x16xf32>
    %84 = tpu.matmul %80, %83, %cst_27 {dimension_numbers = #tpu.dot_dimension_numbers<[1], [0], [0], [1], [0, 0, 1, 1], [], []>} : vector<16x8xf32>, vector<8x16xf32>, vector<16x16xf32> -> vector<16x16xf32>
    %85 = arith.addf %84, %25 : vector<16x16xf32>
    %cst_28 = arith.constant dense<0xFF800000> : vector<16xf32>
    %86 = vector.multi_reduction <maximumf>, %85, %cst_28 [1] : vector<16x16xf32> to vector<16xf32>
    %87 = vector.shape_cast %86 : vector<16xf32> to vector<16x1xf32>
    %88 = vector.broadcast %87 : vector<16x1xf32> to vector<16x16xf32>
    %89 = arith.subf %85, %88 : vector<16x16xf32>
    %90 = math.exp %89 : vector<16x16xf32>
    %cst_29 = arith.constant dense<0.000000e+00> : vector<16xf32>
    %91 = vector.multi_reduction <add>, %90, %cst_29 [1] : vector<16x16xf32> to vector<16xf32>
    %92 = vector.shape_cast %91 : vector<16xf32> to vector<16x1xf32>
    %93 = vector.broadcast %92 : vector<16x1xf32> to vector<16x16xf32>
    %94 = arith.divf %90, %93 : vector<16x16xf32>
    %cst_30 = arith.constant dense<0.000000e+00> : vector<16x8xf32>
    %95 = tpu.matmul %94, %82, %cst_30 {dimension_numbers = #tpu.dot_dimension_numbers<[1], [0], [0], [1], [0, 0, 1, 1], [], []>} : vector<16x16xf32>, vector<16x8xf32>, vector<16x8xf32> -> vector<16x8xf32>
    %96 = tpu.concatenate %47, %63, %79, %95 in 1 : vector<16x8xf32>, vector<16x8xf32>, vector<16x8xf32>, vector<16x8xf32> -> vector<16x32xf32>
    %c0_31 = arith.constant 0 : index
    %c0_32 = arith.constant 0 : index
    %c0_33 = arith.constant 0 : index
    %97 = vector.load %arg4[%c0_31, %c0_32, %c0_33] : memref<2x32x32xf32, #tpu.memory_space<vmem>>, vector<1x32x32xf32>
    %98 = vector.shape_cast %97 : vector<1x32x32xf32> to vector<32x32xf32>
    %cst_34 = arith.constant dense<0.000000e+00> : vector<16x32xf32>
    %99 = tpu.matmul %96, %98, %cst_34 {dimension_numbers = #tpu.dot_dimension_numbers<[1], [0], [0], [1], [0, 0, 1, 1], [], []>} : vector<16x32xf32>, vector<32x32xf32>, vector<16x32xf32> -> vector<16x32xf32>
    %c5 = arith.constant 5 : index
    %c0_35 = arith.constant 0 : index
    %100 = vector.load %arg2[%c5, %c0_35] : memref<20x128xf32, #tpu.memory_space<vmem>>, vector<1x32xf32>
    %101 = vector.broadcast %100 : vector<1x32xf32> to vector<16x32xf32>
    %102 = arith.addf %99, %101 : vector<16x32xf32>
    %103 = arith.addf %102, %24 : vector<16x32xf32>
    %c6 = arith.constant 6 : index
    %c0_36 = arith.constant 0 : index
    %104 = vector.load %arg2[%c6, %c0_36] : memref<20x128xf32, #tpu.memory_space<vmem>>, vector<1x32xf32>
    %c7 = arith.constant 7 : index
    %c0_37 = arith.constant 0 : index
    %105 = vector.load %arg2[%c7, %c0_37] : memref<20x128xf32, #tpu.memory_space<vmem>>, vector<1x32xf32>
    %cst_38 = arith.constant dense<0.000000e+00> : vector<16xf32>
    %106 = vector.multi_reduction <add>, %103, %cst_38 [1] : vector<16x32xf32> to vector<16xf32>
    %107 = vector.shape_cast %106 : vector<16xf32> to vector<16x1xf32>
    %cst_39 = arith.constant 3.200000e+01 : f32
    %108 = vector.broadcast %cst_39 : f32 to vector<16x1xf32>
    %109 = arith.divf %107, %108 : vector<16x1xf32>
    %110 = vector.broadcast %109 : vector<16x1xf32> to vector<16x32xf32>
    %111 = arith.subf %103, %110 : vector<16x32xf32>
    %112 = arith.mulf %111, %111 : vector<16x32xf32>
    %cst_40 = arith.constant dense<0.000000e+00> : vector<16xf32>
    %113 = vector.multi_reduction <add>, %112, %cst_40 [1] : vector<16x32xf32> to vector<16xf32>
    %114 = vector.shape_cast %113 : vector<16xf32> to vector<16x1xf32>
    %cst_41 = arith.constant 3.200000e+01 : f32
    %115 = vector.broadcast %cst_41 : f32 to vector<16x1xf32>
    %116 = arith.divf %114, %115 : vector<16x1xf32>
    %117 = vector.broadcast %109 : vector<16x1xf32> to vector<16x32xf32>
    %118 = arith.subf %103, %117 : vector<16x32xf32>
    %cst_42 = arith.constant 9.99999996E-13 : f32
    %119 = vector.broadcast %cst_42 : f32 to vector<16x1xf32>
    %120 = arith.addf %116, %119 : vector<16x1xf32>
    %121 = math.rsqrt %120 : vector<16x1xf32>
    %122 = vector.broadcast %121 : vector<16x1xf32> to vector<16x32xf32>
    %123 = arith.mulf %118, %122 : vector<16x32xf32>
    %124 = vector.broadcast %104 : vector<1x32xf32> to vector<16x32xf32>
    %125 = arith.mulf %123, %124 : vector<16x32xf32>
    %126 = vector.broadcast %105 : vector<1x32xf32> to vector<16x32xf32>
    %127 = arith.addf %125, %126 : vector<16x32xf32>
    %c0_43 = arith.constant 0 : index
    %c0_44 = arith.constant 0 : index
    %c0_45 = arith.constant 0 : index
    %128 = vector.load %arg5[%c0_43, %c0_44, %c0_45] : memref<2x32x64xf32, #tpu.memory_space<vmem>>, vector<1x32x64xf32>
    %129 = vector.shape_cast %128 : vector<1x32x64xf32> to vector<32x64xf32>
    %cst_46 = arith.constant dense<0.000000e+00> : vector<16x64xf32>
    %130 = tpu.matmul %127, %129, %cst_46 {dimension_numbers = #tpu.dot_dimension_numbers<[1], [0], [0], [1], [0, 0, 1, 1], [], []>} : vector<16x32xf32>, vector<32x64xf32>, vector<16x64xf32> -> vector<16x64xf32>
    %c8 = arith.constant 8 : index
    %c0_47 = arith.constant 0 : index
    %131 = vector.load %arg2[%c8, %c0_47] : memref<20x128xf32, #tpu.memory_space<vmem>>, vector<1x64xf32>
    %132 = vector.broadcast %131 : vector<1x64xf32> to vector<16x64xf32>
    %133 = arith.addf %130, %132 : vector<16x64xf32>
    %cst_48 = arith.constant 5.000000e-01 : f32
    %134 = vector.broadcast %cst_48 : f32 to vector<16x64xf32>
    %135 = arith.mulf %134, %133 : vector<16x64xf32>
    %cst_49 = arith.constant 0.707106769 : f32
    %136 = vector.broadcast %cst_49 : f32 to vector<16x64xf32>
    %137 = arith.mulf %133, %136 : vector<16x64xf32>
    %138 = math.erf %137 : vector<16x64xf32>
    %cst_50 = arith.constant 1.000000e+00 : f32
    %139 = vector.broadcast %cst_50 : f32 to vector<16x64xf32>
    %140 = arith.addf %139, %138 : vector<16x64xf32>
    %141 = arith.mulf %135, %140 : vector<16x64xf32>
    %c0_51 = arith.constant 0 : index
    %c0_52 = arith.constant 0 : index
    %c0_53 = arith.constant 0 : index
    %142 = vector.load %arg6[%c0_51, %c0_52, %c0_53] : memref<2x64x32xf32, #tpu.memory_space<vmem>>, vector<1x64x32xf32>
    %143 = vector.shape_cast %142 : vector<1x64x32xf32> to vector<64x32xf32>
    %cst_54 = arith.constant dense<0.000000e+00> : vector<16x32xf32>
    %144 = tpu.matmul %141, %143, %cst_54 {dimension_numbers = #tpu.dot_dimension_numbers<[1], [0], [0], [1], [0, 0, 1, 1], [], []>} : vector<16x64xf32>, vector<64x32xf32>, vector<16x32xf32> -> vector<16x32xf32>
    %c9 = arith.constant 9 : index
    %c0_55 = arith.constant 0 : index
    %145 = vector.load %arg2[%c9, %c0_55] : memref<20x128xf32, #tpu.memory_space<vmem>>, vector<1x32xf32>
    %146 = vector.broadcast %145 : vector<1x32xf32> to vector<16x32xf32>
    %147 = arith.addf %144, %146 : vector<16x32xf32>
    %148 = arith.addf %147, %127 : vector<16x32xf32>
    %c10 = arith.constant 10 : index
    %c0_56 = arith.constant 0 : index
    %149 = vector.load %arg2[%c10, %c0_56] : memref<20x128xf32, #tpu.memory_space<vmem>>, vector<1x32xf32>
    %c11 = arith.constant 11 : index
    %c0_57 = arith.constant 0 : index
    %150 = vector.load %arg2[%c11, %c0_57] : memref<20x128xf32, #tpu.memory_space<vmem>>, vector<1x32xf32>
    %cst_58 = arith.constant dense<0.000000e+00> : vector<16xf32>
    %151 = vector.multi_reduction <add>, %148, %cst_58 [1] : vector<16x32xf32> to vector<16xf32>
    %152 = vector.shape_cast %151 : vector<16xf32> to vector<16x1xf32>
    %cst_59 = arith.constant 3.200000e+01 : f32
    %153 = vector.broadcast %cst_59 : f32 to vector<16x1xf32>
    %154 = arith.divf %152, %153 : vector<16x1xf32>
    %155 = vector.broadcast %154 : vector<16x1xf32> to vector<16x32xf32>
    %156 = arith.subf %148, %155 : vector<16x32xf32>
    %157 = arith.mulf %156, %156 : vector<16x32xf32>
    %cst_60 = arith.constant dense<0.000000e+00> : vector<16xf32>
    %158 = vector.multi_reduction <add>, %157, %cst_60 [1] : vector<16x32xf32> to vector<16xf32>
    %159 = vector.shape_cast %158 : vector<16xf32> to vector<16x1xf32>
    %cst_61 = arith.constant 3.200000e+01 : f32
    %160 = vector.broadcast %cst_61 : f32 to vector<16x1xf32>
    %161 = arith.divf %159, %160 : vector<16x1xf32>
    %162 = vector.broadcast %154 : vector<16x1xf32> to vector<16x32xf32>
    %163 = arith.subf %148, %162 : vector<16x32xf32>
    %cst_62 = arith.constant 9.99999996E-13 : f32
    %164 = vector.broadcast %cst_62 : f32 to vector<16x1xf32>
    %165 = arith.addf %161, %164 : vector<16x1xf32>
    %166 = math.rsqrt %165 : vector<16x1xf32>
    %167 = vector.broadcast %166 : vector<16x1xf32> to vector<16x32xf32>
    %168 = arith.mulf %163, %167 : vector<16x32xf32>
    %169 = vector.broadcast %149 : vector<1x32xf32> to vector<16x32xf32>
    %170 = arith.mulf %168, %169 : vector<16x32xf32>
    %171 = vector.broadcast %150 : vector<1x32xf32> to vector<16x32xf32>
    %172 = arith.addf %170, %171 : vector<16x32xf32>
    %c1_63 = arith.constant 1 : index
    %c0_64 = arith.constant 0 : index
    %c0_65 = arith.constant 0 : index
    %173 = vector.load %arg3[%c1_63, %c0_64, %c0_65] : memref<2x32x96xf32, #tpu.memory_space<vmem>>, vector<1x32x96xf32>
    %174 = vector.shape_cast %173 : vector<1x32x96xf32> to vector<32x96xf32>
    %cst_66 = arith.constant dense<0.000000e+00> : vector<16x96xf32>
    %175 = tpu.matmul %172, %174, %cst_66 {dimension_numbers = #tpu.dot_dimension_numbers<[1], [0], [0], [1], [0, 0, 1, 1], [], []>} : vector<16x32xf32>, vector<32x96xf32>, vector<16x96xf32> -> vector<16x96xf32>
    %c12 = arith.constant 12 : index
    %c0_67 = arith.constant 0 : index
    %176 = vector.load %arg2[%c12, %c0_67] : memref<20x128xf32, #tpu.memory_space<vmem>>, vector<1x96xf32>
    %177 = vector.broadcast %176 : vector<1x96xf32> to vector<16x96xf32>
    %178 = arith.addf %175, %177 : vector<16x96xf32>
    %179 = vector.extract_strided_slice %178 {offsets = [0, 0], sizes = [16, 8], strides = [1, 1]} : vector<16x96xf32> to vector<16x8xf32>
    %180 = vector.extract_strided_slice %178 {offsets = [0, 32], sizes = [16, 8], strides = [1, 1]} : vector<16x96xf32> to vector<16x8xf32>
    %181 = vector.extract_strided_slice %178 {offsets = [0, 64], sizes = [16, 8], strides = [1, 1]} : vector<16x96xf32> to vector<16x8xf32>
    %182 = tpu.transpose %180, [1, 0] : vector<16x8xf32> -> vector<8x16xf32>
    %cst_68 = arith.constant dense<0.000000e+00> : vector<16x16xf32>
    %183 = tpu.matmul %179, %182, %cst_68 {dimension_numbers = #tpu.dot_dimension_numbers<[1], [0], [0], [1], [0, 0, 1, 1], [], []>} : vector<16x8xf32>, vector<8x16xf32>, vector<16x16xf32> -> vector<16x16xf32>
    %184 = arith.addf %183, %25 : vector<16x16xf32>
    %cst_69 = arith.constant dense<0xFF800000> : vector<16xf32>
    %185 = vector.multi_reduction <maximumf>, %184, %cst_69 [1] : vector<16x16xf32> to vector<16xf32>
    %186 = vector.shape_cast %185 : vector<16xf32> to vector<16x1xf32>
    %187 = vector.broadcast %186 : vector<16x1xf32> to vector<16x16xf32>
    %188 = arith.subf %184, %187 : vector<16x16xf32>
    %189 = math.exp %188 : vector<16x16xf32>
    %cst_70 = arith.constant dense<0.000000e+00> : vector<16xf32>
    %190 = vector.multi_reduction <add>, %189, %cst_70 [1] : vector<16x16xf32> to vector<16xf32>
    %191 = vector.shape_cast %190 : vector<16xf32> to vector<16x1xf32>
    %192 = vector.broadcast %191 : vector<16x1xf32> to vector<16x16xf32>
    %193 = arith.divf %189, %192 : vector<16x16xf32>
    %cst_71 = arith.constant dense<0.000000e+00> : vector<16x8xf32>
    %194 = tpu.matmul %193, %181, %cst_71 {dimension_numbers = #tpu.dot_dimension_numbers<[1], [0], [0], [1], [0, 0, 1, 1], [], []>} : vector<16x16xf32>, vector<16x8xf32>, vector<16x8xf32> -> vector<16x8xf32>
    %195 = vector.extract_strided_slice %178 {offsets = [0, 8], sizes = [16, 8], strides = [1, 1]} : vector<16x96xf32> to vector<16x8xf32>
    %196 = vector.extract_strided_slice %178 {offsets = [0, 40], sizes = [16, 8], strides = [1, 1]} : vector<16x96xf32> to vector<16x8xf32>
    %197 = vector.extract_strided_slice %178 {offsets = [0, 72], sizes = [16, 8], strides = [1, 1]} : vector<16x96xf32> to vector<16x8xf32>
    %198 = tpu.transpose %196, [1, 0] : vector<16x8xf32> -> vector<8x16xf32>
    %cst_72 = arith.constant dense<0.000000e+00> : vector<16x16xf32>
    %199 = tpu.matmul %195, %198, %cst_72 {dimension_numbers = #tpu.dot_dimension_numbers<[1], [0], [0], [1], [0, 0, 1, 1], [], []>} : vector<16x8xf32>, vector<8x16xf32>, vector<16x16xf32> -> vector<16x16xf32>
    %200 = arith.addf %199, %25 : vector<16x16xf32>
    %cst_73 = arith.constant dense<0xFF800000> : vector<16xf32>
    %201 = vector.multi_reduction <maximumf>, %200, %cst_73 [1] : vector<16x16xf32> to vector<16xf32>
    %202 = vector.shape_cast %201 : vector<16xf32> to vector<16x1xf32>
    %203 = vector.broadcast %202 : vector<16x1xf32> to vector<16x16xf32>
    %204 = arith.subf %200, %203 : vector<16x16xf32>
    %205 = math.exp %204 : vector<16x16xf32>
    %cst_74 = arith.constant dense<0.000000e+00> : vector<16xf32>
    %206 = vector.multi_reduction <add>, %205, %cst_74 [1] : vector<16x16xf32> to vector<16xf32>
    %207 = vector.shape_cast %206 : vector<16xf32> to vector<16x1xf32>
    %208 = vector.broadcast %207 : vector<16x1xf32> to vector<16x16xf32>
    %209 = arith.divf %205, %208 : vector<16x16xf32>
    %cst_75 = arith.constant dense<0.000000e+00> : vector<16x8xf32>
    %210 = tpu.matmul %209, %197, %cst_75 {dimension_numbers = #tpu.dot_dimension_numbers<[1], [0], [0], [1], [0, 0, 1, 1], [], []>} : vector<16x16xf32>, vector<16x8xf32>, vector<16x8xf32> -> vector<16x8xf32>
    %211 = vector.extract_strided_slice %178 {offsets = [0, 16], sizes = [16, 8], strides = [1, 1]} : vector<16x96xf32> to vector<16x8xf32>
    %212 = vector.extract_strided_slice %178 {offsets = [0, 48], sizes = [16, 8], strides = [1, 1]} : vector<16x96xf32> to vector<16x8xf32>
    %213 = vector.extract_strided_slice %178 {offsets = [0, 80], sizes = [16, 8], strides = [1, 1]} : vector<16x96xf32> to vector<16x8xf32>
    %214 = tpu.transpose %212, [1, 0] : vector<16x8xf32> -> vector<8x16xf32>
    %cst_76 = arith.constant dense<0.000000e+00> : vector<16x16xf32>
    %215 = tpu.matmul %211, %214, %cst_76 {dimension_numbers = #tpu.dot_dimension_numbers<[1], [0], [0], [1], [0, 0, 1, 1], [], []>} : vector<16x8xf32>, vector<8x16xf32>, vector<16x16xf32> -> vector<16x16xf32>
    %216 = arith.addf %215, %25 : vector<16x16xf32>
    %cst_77 = arith.constant dense<0xFF800000> : vector<16xf32>
    %217 = vector.multi_reduction <maximumf>, %216, %cst_77 [1] : vector<16x16xf32> to vector<16xf32>
    %218 = vector.shape_cast %217 : vector<16xf32> to vector<16x1xf32>
    %219 = vector.broadcast %218 : vector<16x1xf32> to vector<16x16xf32>
    %220 = arith.subf %216, %219 : vector<16x16xf32>
    %221 = math.exp %220 : vector<16x16xf32>
    %cst_78 = arith.constant dense<0.000000e+00> : vector<16xf32>
    %222 = vector.multi_reduction <add>, %221, %cst_78 [1] : vector<16x16xf32> to vector<16xf32>
    %223 = vector.shape_cast %222 : vector<16xf32> to vector<16x1xf32>
    %224 = vector.broadcast %223 : vector<16x1xf32> to vector<16x16xf32>
    %225 = arith.divf %221, %224 : vector<16x16xf32>
    %cst_79 = arith.constant dense<0.000000e+00> : vector<16x8xf32>
    %226 = tpu.matmul %225, %213, %cst_79 {dimension_numbers = #tpu.dot_dimension_numbers<[1], [0], [0], [1], [0, 0, 1, 1], [], []>} : vector<16x16xf32>, vector<16x8xf32>, vector<16x8xf32> -> vector<16x8xf32>
    %227 = vector.extract_strided_slice %178 {offsets = [0, 24], sizes = [16, 8], strides = [1, 1]} : vector<16x96xf32> to vector<16x8xf32>
    %228 = vector.extract_strided_slice %178 {offsets = [0, 56], sizes = [16, 8], strides = [1, 1]} : vector<16x96xf32> to vector<16x8xf32>
    %229 = vector.extract_strided_slice %178 {offsets = [0, 88], sizes = [16, 8], strides = [1, 1]} : vector<16x96xf32> to vector<16x8xf32>
    %230 = tpu.transpose %228, [1, 0] : vector<16x8xf32> -> vector<8x16xf32>
    %cst_80 = arith.constant dense<0.000000e+00> : vector<16x16xf32>
    %231 = tpu.matmul %227, %230, %cst_80 {dimension_numbers = #tpu.dot_dimension_numbers<[1], [0], [0], [1], [0, 0, 1, 1], [], []>} : vector<16x8xf32>, vector<8x16xf32>, vector<16x16xf32> -> vector<16x16xf32>
    %232 = arith.addf %231, %25 : vector<16x16xf32>
    %cst_81 = arith.constant dense<0xFF800000> : vector<16xf32>
    %233 = vector.multi_reduction <maximumf>, %232, %cst_81 [1] : vector<16x16xf32> to vector<16xf32>
    %234 = vector.shape_cast %233 : vector<16xf32> to vector<16x1xf32>
    %235 = vector.broadcast %234 : vector<16x1xf32> to vector<16x16xf32>
    %236 = arith.subf %232, %235 : vector<16x16xf32>
    %237 = math.exp %236 : vector<16x16xf32>
    %cst_82 = arith.constant dense<0.000000e+00> : vector<16xf32>
    %238 = vector.multi_reduction <add>, %237, %cst_82 [1] : vector<16x16xf32> to vector<16xf32>
    %239 = vector.shape_cast %238 : vector<16xf32> to vector<16x1xf32>
    %240 = vector.broadcast %239 : vector<16x1xf32> to vector<16x16xf32>
    %241 = arith.divf %237, %240 : vector<16x16xf32>
    %cst_83 = arith.constant dense<0.000000e+00> : vector<16x8xf32>
    %242 = tpu.matmul %241, %229, %cst_83 {dimension_numbers = #tpu.dot_dimension_numbers<[1], [0], [0], [1], [0, 0, 1, 1], [], []>} : vector<16x16xf32>, vector<16x8xf32>, vector<16x8xf32> -> vector<16x8xf32>
    %243 = tpu.concatenate %194, %210, %226, %242 in 1 : vector<16x8xf32>, vector<16x8xf32>, vector<16x8xf32>, vector<16x8xf32> -> vector<16x32xf32>
    %c1_84 = arith.constant 1 : index
    %c0_85 = arith.constant 0 : index
    %c0_86 = arith.constant 0 : index
    %244 = vector.load %arg4[%c1_84, %c0_85, %c0_86] : memref<2x32x32xf32, #tpu.memory_space<vmem>>, vector<1x32x32xf32>
    %245 = vector.shape_cast %244 : vector<1x32x32xf32> to vector<32x32xf32>
    %cst_87 = arith.constant dense<0.000000e+00> : vector<16x32xf32>
    %246 = tpu.matmul %243, %245, %cst_87 {dimension_numbers = #tpu.dot_dimension_numbers<[1], [0], [0], [1], [0, 0, 1, 1], [], []>} : vector<16x32xf32>, vector<32x32xf32>, vector<16x32xf32> -> vector<16x32xf32>
    %c13 = arith.constant 13 : index
    %c0_88 = arith.constant 0 : index
    %247 = vector.load %arg2[%c13, %c0_88] : memref<20x128xf32, #tpu.memory_space<vmem>>, vector<1x32xf32>
    %248 = vector.broadcast %247 : vector<1x32xf32> to vector<16x32xf32>
    %249 = arith.addf %246, %248 : vector<16x32xf32>
    %250 = arith.addf %249, %172 : vector<16x32xf32>
    %c14 = arith.constant 14 : index
    %c0_89 = arith.constant 0 : index
    %251 = vector.load %arg2[%c14, %c0_89] : memref<20x128xf32, #tpu.memory_space<vmem>>, vector<1x32xf32>
    %c15 = arith.constant 15 : index
    %c0_90 = arith.constant 0 : index
    %252 = vector.load %arg2[%c15, %c0_90] : memref<20x128xf32, #tpu.memory_space<vmem>>, vector<1x32xf32>
    %cst_91 = arith.constant dense<0.000000e+00> : vector<16xf32>
    %253 = vector.multi_reduction <add>, %250, %cst_91 [1] : vector<16x32xf32> to vector<16xf32>
    %254 = vector.shape_cast %253 : vector<16xf32> to vector<16x1xf32>
    %cst_92 = arith.constant 3.200000e+01 : f32
    %255 = vector.broadcast %cst_92 : f32 to vector<16x1xf32>
    %256 = arith.divf %254, %255 : vector<16x1xf32>
    %257 = vector.broadcast %256 : vector<16x1xf32> to vector<16x32xf32>
    %258 = arith.subf %250, %257 : vector<16x32xf32>
    %259 = arith.mulf %258, %258 : vector<16x32xf32>
    %cst_93 = arith.constant dense<0.000000e+00> : vector<16xf32>
    %260 = vector.multi_reduction <add>, %259, %cst_93 [1] : vector<16x32xf32> to vector<16xf32>
    %261 = vector.shape_cast %260 : vector<16xf32> to vector<16x1xf32>
    %cst_94 = arith.constant 3.200000e+01 : f32
    %262 = vector.broadcast %cst_94 : f32 to vector<16x1xf32>
    %263 = arith.divf %261, %262 : vector<16x1xf32>
    %264 = vector.broadcast %256 : vector<16x1xf32> to vector<16x32xf32>
    %265 = arith.subf %250, %264 : vector<16x32xf32>
    %cst_95 = arith.constant 9.99999996E-13 : f32
    %266 = vector.broadcast %cst_95 : f32 to vector<16x1xf32>
    %267 = arith.addf %263, %266 : vector<16x1xf32>
    %268 = math.rsqrt %267 : vector<16x1xf32>
    %269 = vector.broadcast %268 : vector<16x1xf32> to vector<16x32xf32>
    %270 = arith.mulf %265, %269 : vector<16x32xf32>
    %271 = vector.broadcast %251 : vector<1x32xf32> to vector<16x32xf32>
    %272 = arith.mulf %270, %271 : vector<16x32xf32>
    %273 = vector.broadcast %252 : vector<1x32xf32> to vector<16x32xf32>
    %274 = arith.addf %272, %273 : vector<16x32xf32>
    %c1_96 = arith.constant 1 : index
    %c0_97 = arith.constant 0 : index
    %c0_98 = arith.constant 0 : index
    %275 = vector.load %arg5[%c1_96, %c0_97, %c0_98] : memref<2x32x64xf32, #tpu.memory_space<vmem>>, vector<1x32x64xf32>
    %276 = vector.shape_cast %275 : vector<1x32x64xf32> to vector<32x64xf32>
    %cst_99 = arith.constant dense<0.000000e+00> : vector<16x64xf32>
    %277 = tpu.matmul %274, %276, %cst_99 {dimension_numbers = #tpu.dot_dimension_numbers<[1], [0], [0], [1], [0, 0, 1, 1], [], []>} : vector<16x32xf32>, vector<32x64xf32>, vector<16x64xf32> -> vector<16x64xf32>
    %c16 = arith.constant 16 : index
    %c0_100 = arith.constant 0 : index
    %278 = vector.load %arg2[%c16, %c0_100] : memref<20x128xf32, #tpu.memory_space<vmem>>, vector<1x64xf32>
    %279 = vector.broadcast %278 : vector<1x64xf32> to vector<16x64xf32>
    %280 = arith.addf %277, %279 : vector<16x64xf32>
    %cst_101 = arith.constant 5.000000e-01 : f32
    %281 = vector.broadcast %cst_101 : f32 to vector<16x64xf32>
    %282 = arith.mulf %281, %280 : vector<16x64xf32>
    %cst_102 = arith.constant 0.707106769 : f32
    %283 = vector.broadcast %cst_102 : f32 to vector<16x64xf32>
    %284 = arith.mulf %280, %283 : vector<16x64xf32>
    %285 = math.erf %284 : vector<16x64xf32>
    %cst_103 = arith.constant 1.000000e+00 : f32
    %286 = vector.broadcast %cst_103 : f32 to vector<16x64xf32>
    %287 = arith.addf %286, %285 : vector<16x64xf32>
    %288 = arith.mulf %282, %287 : vector<16x64xf32>
    %c1_104 = arith.constant 1 : index
    %c0_105 = arith.constant 0 : index
    %c0_106 = arith.constant 0 : index
    %289 = vector.load %arg6[%c1_104, %c0_105, %c0_106] : memref<2x64x32xf32, #tpu.memory_space<vmem>>, vector<1x64x32xf32>
    %290 = vector.shape_cast %289 : vector<1x64x32xf32> to vector<64x32xf32>
    %cst_107 = arith.constant dense<0.000000e+00> : vector<16x32xf32>
    %291 = tpu.matmul %288, %290, %cst_107 {dimension_numbers = #tpu.dot_dimension_numbers<[1], [0], [0], [1], [0, 0, 1, 1], [], []>} : vector<16x64xf32>, vector<64x32xf32>, vector<16x32xf32> -> vector<16x32xf32>
    %c17 = arith.constant 17 : index
    %c0_108 = arith.constant 0 : index
    %292 = vector.load %arg2[%c17, %c0_108] : memref<20x128xf32, #tpu.memory_space<vmem>>, vector<1x32xf32>
    %293 = vector.broadcast %292 : vector<1x32xf32> to vector<16x32xf32>
    %294 = arith.addf %291, %293 : vector<16x32xf32>
    %295 = arith.addf %294, %274 : vector<16x32xf32>
    %c18 = arith.constant 18 : index
    %c0_109 = arith.constant 0 : index
    %296 = vector.load %arg2[%c18, %c0_109] : memref<20x128xf32, #tpu.memory_space<vmem>>, vector<1x32xf32>
    %c19 = arith.constant 19 : index
    %c0_110 = arith.constant 0 : index
    %297 = vector.load %arg2[%c19, %c0_110] : memref<20x128xf32, #tpu.memory_space<vmem>>, vector<1x32xf32>
    %cst_111 = arith.constant dense<0.000000e+00> : vector<16xf32>
    %298 = vector.multi_reduction <add>, %295, %cst_111 [1] : vector<16x32xf32> to vector<16xf32>
    %299 = vector.shape_cast %298 : vector<16xf32> to vector<16x1xf32>
    %cst_112 = arith.constant 3.200000e+01 : f32
    %300 = vector.broadcast %cst_112 : f32 to vector<16x1xf32>
    %301 = arith.divf %299, %300 : vector<16x1xf32>
    %302 = vector.broadcast %301 : vector<16x1xf32> to vector<16x32xf32>
    %303 = arith.subf %295, %302 : vector<16x32xf32>
    %304 = arith.mulf %303, %303 : vector<16x32xf32>
    %cst_113 = arith.constant dense<0.000000e+00> : vector<16xf32>
    %305 = vector.multi_reduction <add>, %304, %cst_113 [1] : vector<16x32xf32> to vector<16xf32>
    %306 = vector.shape_cast %305 : vector<16xf32> to vector<16x1xf32>
    %cst_114 = arith.constant 3.200000e+01 : f32
    %307 = vector.broadcast %cst_114 : f32 to vector<16x1xf32>
    %308 = arith.divf %306, %307 : vector<16x1xf32>
    %309 = vector.broadcast %301 : vector<16x1xf32> to vector<16x32xf32>
    %310 = arith.subf %295, %309 : vector<16x32xf32>
    %cst_115 = arith.constant 9.99999996E-13 : f32
    %311 = vector.broadcast %cst_115 : f32 to vector<16x1xf32>
    %312 = arith.addf %308, %311 : vector<16x1xf32>
    %313 = math.rsqrt %312 : vector<16x1xf32>
    %314 = vector.broadcast %313 : vector<16x1xf32> to vector<16x32xf32>
    %315 = arith.mulf %310, %314 : vector<16x32xf32>
    %316 = vector.broadcast %296 : vector<1x32xf32> to vector<16x32xf32>
    %317 = arith.mulf %315, %316 : vector<16x32xf32>
    %318 = vector.broadcast %297 : vector<1x32xf32> to vector<16x32xf32>
    %319 = arith.addf %317, %318 : vector<16x32xf32>
    %320 = vector.extract_strided_slice %319 {offsets = [0, 0], sizes = [1, 32], strides = [1, 1]} : vector<16x32xf32> to vector<1x32xf32>
    %321 = vector.extract_strided_slice %319 {offsets = [8, 0], sizes = [1, 32], strides = [1, 1]} : vector<16x32xf32> to vector<1x32xf32>
    %322 = tpu.concatenate %320, %321 in 0 : vector<1x32xf32>, vector<1x32xf32> -> vector<2x32xf32>
    %c0_116 = arith.constant 0 : index
    %c0_117 = arith.constant 0 : index
    %323 = vector.load %arg7[%c0_116, %c0_117] : memref<32x128xf32, #tpu.memory_space<vmem>>, vector<32x128xf32>
    %cst_118 = arith.constant dense<0.000000e+00> : vector<2x128xf32>
    %324 = tpu.matmul %322, %323, %cst_118 {dimension_numbers = #tpu.dot_dimension_numbers<[1], [0], [0], [1], [0, 0, 1, 1], [], []>} : vector<2x32xf32>, vector<32x128xf32>, vector<2x128xf32> -> vector<2x128xf32>
    %c2 = arith.constant 2 : index
    %c0_119 = arith.constant 0 : index
    %325 = vector.load %arg2[%c2, %c0_119] : memref<20x128xf32, #tpu.memory_space<vmem>>, vector<1x128xf32>
    %326 = vector.broadcast %325 : vector<1x128xf32> to vector<2x128xf32>
    %327 = arith.addf %324, %326 : vector<2x128xf32>
    %328 = math.tanh %327 : vector<2x128xf32>
    %c0_120 = arith.constant 0 : index
    %c0_121 = arith.constant 0 : index
    %329 = vector.load %arg8[%c0_120, %c0_121] : memref<128x128xf32, #tpu.memory_space<vmem>>, vector<128x128xf32>
    %cst_122 = arith.constant dense<0.000000e+00> : vector<2x128xf32>
    %330 = tpu.matmul %328, %329, %cst_122 {dimension_numbers = #tpu.dot_dimension_numbers<[1], [0], [0], [1], [0, 0, 1, 1], [], []>} : vector<2x128xf32>, vector<128x128xf32>, vector<2x128xf32> -> vector<2x128xf32>
    %c3 = arith.constant 3 : index
    %c0_123 = arith.constant 0 : index
    %331 = vector.load %arg2[%c3, %c0_123] : memref<20x128xf32, #tpu.memory_space<vmem>>, vector<1x128xf32>
    %332 = vector.broadcast %331 : vector<1x128xf32> to vector<2x128xf32>
    %333 = arith.addf %330, %332 : vector<2x128xf32>
    %334 = arith.mulf %328, %328 : vector<2x128xf32>
    %cst_124 = arith.constant dense<0.000000e+00> : vector<2xf32>
    %335 = vector.multi_reduction <add>, %334, %cst_124 [1] : vector<2x128xf32> to vector<2xf32>
    %336 = vector.shape_cast %335 : vector<2xf32> to vector<2x1xf32>
    %cst_125 = arith.constant 1.000000e-24 : f32
    %337 = vector.broadcast %cst_125 : f32 to vector<2x1xf32>
    %338 = arith.maximumf %336, %337 : vector<2x1xf32>
    %339 = math.rsqrt %338 : vector<2x1xf32>
    %340 = vector.broadcast %339 : vector<2x1xf32> to vector<2x128xf32>
    %341 = arith.mulf %328, %340 : vector<2x128xf32>
    %c0_126 = arith.constant 0 : index
    %c0_127 = arith.constant 0 : index
    %342 = vector.load %arg9[%c0_126, %c0_127] : memref<2x256xf32, #tpu.memory_space<vmem>>, vector<2x128xf32>
    tpu.vector_store %arg9[%c0_126, %c0_127], %333 {strides = array<i32>} : memref<2x256xf32, #tpu.memory_space<vmem>>, vector<2x128xf32>,
    %c0_128 = arith.constant 0 : index
    %c128 = arith.constant 128 : index
    %343 = vector.load %arg9[%c0_128, %c128] : memref<2x256xf32, #tpu.memory_space<vmem>>, vector<2x128xf32>
    tpu.vector_store %arg9[%c0_128, %c128], %341 {strides = array<i32>} : memref<2x256xf32, #tpu.memory_space<vmem>>, vector<2x128xf32>,
    return
  }
}

</mosaic_0001>

<llo_original>
// kernel: net_forward.1
$region0: #{net_forward.1}
  #allocation0 [shape = 'u32[]', space=smem, size = 0x4, offset = 0x4, fixed_abs, tag = 'smem constant byte address 0x4 - core index']
  #allocation1 [shape = 'u32[72,128]{1,0:T(1,128)}', space=vmem, size = 0x9000, scoped, tag = 'internal scratch']
  %s0 = inlined_call_operand.vmem [shape: f32[16,32], index: 0, kind: input, shape index: {}]
  %s1 = inlined_call_operand.vmem [shape: f32[16,16], index: 1, kind: input, shape index: {}]
  %s2 = inlined_call_operand.vmem [shape: f32[20,128], index: 2, kind: input, shape index: {}]
  %s3 = inlined_call_operand.vmem [shape: f32[2,32,96], index: 3, kind: input, shape index: {}]
  %s4 = inlined_call_operand.vmem [shape: f32[2,32,32], index: 4, kind: input, shape index: {}]
  %s5 = inlined_call_operand.vmem [shape: f32[2,32,64], index: 5, kind: input, shape index: {}]
  %s6 = inlined_call_operand.vmem [shape: f32[2,64,32], index: 6, kind: input, shape index: {}]
  %s7 = inlined_call_operand.vmem [shape: f32[32,128], index: 7, kind: input, shape index: {}]
  %s8 = inlined_call_operand.vmem [shape: f32[128,128], index: 8, kind: input, shape index: {}]
  %s9 = inlined_call_operand.vmem [shape: f32[2,256], index: 9, kind: output, shape index: {}]
  %s10 = sld [smem:[#allocation0]]
  $region46: #{net_forward.1} parent=0
    _
  %s12 = ssub.s32 1, %s10
  %s13 = scalar_select 0, %s12, %s10
  // Predicated region
  $region2: #{net_forward.1} parent=0 // pred_check
    _
  $region3: #{net_forward.1} parent=0 // pred_check_branch
    %15 = sbr.rel (0) target = $region5
  $region4: #{net_forward.1} parent=0 // pred_region
    _
  $region5: #{net_forward.1} parent=0 // pred_fallthru
    _
  // Predicated region
  $region6: #{net_forward.1} parent=0 // pred_check
    _
  $region7: #{net_forward.1} parent=0 // pred_check_branch
    %17 = sbr.rel (0) target = $region9
  $region8: #{net_forward.1} parent=0 // pred_region
    _
  $region9: #{net_forward.1} parent=0 // pred_fallthru
    _
  // Predicated region
  $region10: #{net_forward.1} parent=0 // pred_check
    _
  $region11: #{net_forward.1} parent=0 // pred_check_branch
    %19 = sbr.rel (0) target = $region13
  $region12: #{net_forward.1} parent=0 // pred_region
    _
  $region13: #{net_forward.1} parent=0 // pred_fallthru
    _
  // Predicated region
  $region14: #{net_forward.1} parent=0 // pred_check
    _
  $region15: #{net_forward.1} parent=0 // pred_check_branch
    %21 = sbr.rel (0) target = $region17
  $region16: #{net_forward.1} parent=0 // pred_region
    _
  $region17: #{net_forward.1} parent=0 // pred_fallthru
    _
  // Predicated region
  $region18: #{net_forward.1} parent=0 // pred_check
    _
  $region19: #{net_forward.1} parent=0 // pred_check_branch
    %23 = sbr.rel (0) target = $region21
  $region20: #{net_forward.1} parent=0 // pred_region
    _
  $region21: #{net_forward.1} parent=0 // pred_fallthru
    _
  // Predicated region
  $region22: #{net_forward.1} parent=0 // pred_check
    _
  $region23: #{net_forward.1} parent=0 // pred_check_branch
    %25 = sbr.rel (0) target = $region25
  $region24: #{net_forward.1} parent=0 // pred_region
    _
  $region25: #{net_forward.1} parent=0 // pred_fallthru
    _
  // Predicated region
  $region26: #{net_forward.1} parent=0 // pred_check
    _
  $region27: #{net_forward.1} parent=0 // pred_check_branch
    %27 = sbr.rel (0) target = $region29
  $region28: #{net_forward.1} parent=0 // pred_region
    _
  $region29: #{net_forward.1} parent=0 // pred_fallthru
    _
  // Predicated region
  $region30: #{net_forward.1} parent=0 // pred_check
    _
  $region31: #{net_forward.1} parent=0 // pred_check_branch
    %29 = sbr.rel (0) target = $region33
  $region32: #{net_forward.1} parent=0 // pred_region
    _
  $region33: #{net_forward.1} parent=0 // pred_fallthru
    _
  // Predicated region
  $region34: #{net_forward.1} parent=0 // pred_check
    _
  $region35: #{net_forward.1} parent=0 // pred_check_branch
    %31 = sbr.rel (0) target = $region37
  $region36: #{net_forward.1} parent=0 // pred_region
    _
  $region37: #{net_forward.1} parent=0 // pred_fallthru
    _
  %v32 = vld [vmem:[%s0] sm:$0xff]
  %v33 = vld [vmem:[%s0 + $0x8] sm:$0xff]
  %v34 = vld [vmem:[%s2] sm:$0x1]
  %v35 = vld [vmem:[%s2 + $0x1] sm:$0x1]
  %vm36 = vcmask 261120
  %v37 = vsel %vm36, %v32, 0.0
  %38 = vadd.xlane.f32.xlu0 %v37
  %v39 = vpop.xlane.xlu0 %38
  %v40 = vsel %vm36, %v33, 0.0
  %41 = vadd.xlane.f32.xlu0 %v40
  %v42 = vpop.xlane.xlu0 %41
  %v43 = vrcp.pop 32.0
  %v44 = vmul.f32 32.0, %v43
  %v45 = vsub.f32 1.0, %v44
  %v46 = vmul.f32 %v43, %v45
  %v47 = vadd.f32 %v43, %v46
  %vm48 = vweird.f32 %v43
  %v49 = vsel %vm48, %v43, %v47
  %v50 = vmul.f32 %v39, %v49
  %v51 = vmul.f32 %v42, %v49
  %v52 = vsub.f32 %v32, %v50
  %v53 = vsub.f32 %v33, %v51
  %v54 = vmul.f32 %v52, %v52
  %v55 = vmul.f32 %v53, %v53
  %v56 = vsel %vm36, %v54, 0.0
  %57 = vadd.xlane.f32.xlu0 %v56
  %v58 = vpop.xlane.xlu0 %57
  %v59 = vsel %vm36, %v55, 0.0
  %60 = vadd.xlane.f32.xlu0 %v59
  %v61 = vpop.xlane.xlu0 %60
  %v62 = vmul.f32 %v58, %v49
  %v63 = vmul.f32 %v61, %v49
  %v64 = vadd.f32 %v62, 1e-12
  %v65 = vadd.f32 %v63, 1e-12
  %v66 = vrsqrt.pop %v64
  %v67 = vmul.f32 %v66, %v64
  %v68 = vmul.f32 %v67, %v66
  %v69 = vmul.f32 0.5, %v68
  %v70 = vsub.f32 1.5, %v69
  %v71 = vmul.f32 %v66, %v70
  %vm72 = vweird.f32 %v64
  %vm73 = vweird.f32 %v66
  %vm74 = vmor %vm72, %vm73
  %v75 = vsel %vm74, %v66, %v71
  %v76 = vrsqrt.pop %v65
  %v77 = vmul.f32 %v76, %v65
  %v78 = vmul.f32 %v77, %v76
  %v79 = vmul.f32 0.5, %v78
  %v80 = vsub.f32 1.5, %v79
  %v81 = vmul.f32 %v76, %v80
  %vm82 = vweird.f32 %v65
  %vm83 = vweird.f32 %v76
  %vm84 = vmor %vm82, %vm83
  %v85 = vsel %vm84, %v76, %v81
  %v86 = vmul.f32 %v52, %v75
  %v87 = vmul.f32 %v53, %v85
  %v88 = vperm.slane %v34, 0
  %v89 = vmul.f32 %v86, %v88
  %v90 = vmul.f32 %v87, %v88
  %v91 = vperm.slane %v35, 0
  %v92 = vadd.f32 %v89, %v91
  %v93 = vadd.f32 %v90, %v91
  %v94 = vld [vmem:[%s1] sm:$0xff]
  %v95 = vld [vmem:[%s1 + $0x8] sm:$0xff]
  %v96 = vld [vmem:[%s3] sm:$0xff]
  %v97 = vld [vmem:[%s3 + $0x8] sm:$0xff]
  %v98 = vld [vmem:[%s3 + $0x10] sm:$0xff]
  %v99 = vld [vmem:[%s3 + $0x18] sm:$0xff]
  %v100 = vld [vmem:[%s2 + $0x4] sm:$0x1]
  %v101 = vperm.slane %v100, 0
  %v103 = vsel %vm36, %v92, 0
  %v106 = vsel %vm36, %v93, 0
  %108 = vmatpush.msra.mxu0 0.0
  %109 = vmatpush.msra.mxu0 0.0
  %110 = vmatpush.msra.mxu0 0.0
  %111 = vmatpush.msra.mxu0 0.0
  %112 = vmatpush.msra.mxu0 0.0
  %113 = vmatpush.msra.mxu0 0.0
  %114 = vmatpush.msra.mxu0 0.0
  %115 = vmatpush.msra.mxu0 0.0
  %116 = vmatpush.msra.mxu0 0.0
  %117 = vmatpush.msra.mxu0 0.0
  %118 = vmatpush.msra.mxu0 0.0
  %119 = vmatpush.msra.mxu0 0.0
  %120 = vmatpush.msra.mxu0 %v99
  %121 = vmatpush.msra.mxu0 %v98
  %122 = vmatpush.msra.mxu0 %v97
  %123 = vmatpush.msra.mxu0 %v96
  %124 = vmatmul.f32.gmra.mxu0 %v103
  %v125 = vpop.f32.mrf.mxu0
  %v126 = vadd.f32 %v101, %v125
  %127 = vmatmul.f32.gmra.mxu0 %v106
  %v128 = vpop.f32.mrf.mxu0
  %v129 = vadd.f32 %v101, %v128
  %130 = vdwg.mxu0
  %133 = vrot.lane.b32.xlu0 %v126, 96
  %v134 = vpop.permute.xlu0 %133
  %135 = vrot.lane.b32.xlu0 %v129, 96
  %v136 = vpop.permute.xlu0 %135
  %vm137 = vcmask 64512
  %v138 = vsel %vm137, %v126, 0
  %v140 = vsel %vm137, %v129, 0
  %v142 = vsel %vm137, %v134, 0
  %v144 = vsel %vm137, %v136, 0
  %146 = vmatpush.xpose.msra.mxu0 0.0
  %147 = vmatpush.xpose.msra.mxu0 0.0
  %148 = vmatpush.xpose.msra.mxu0 0.0
  %149 = vmatpush.xpose.msra.mxu0 0.0
  %150 = vmatpush.xpose.msra.mxu0 0.0
  %151 = vmatpush.xpose.msra.mxu0 0.0
  %152 = vmatpush.xpose.msra.mxu0 0.0
  %153 = vmatpush.xpose.msra.mxu0 0.0
  %154 = vmatpush.xpose.msra.mxu0 0.0
  %155 = vmatpush.xpose.msra.mxu0 0.0
  %156 = vmatpush.xpose.msra.mxu0 0.0
  %157 = vmatpush.xpose.msra.mxu0 0.0
  %158 = vmatpush.xpose.msra.mxu0 0.0
  %159 = vmatpush.xpose.msra.mxu0 0.0
  %160 = vmatpush.xpose.msra.mxu0 %v144
  %161 = vmatpush.xpose.msra.mxu0 %v142
  %162 = vmatmul.f32.gmra.mxu0 %v138
  %v163 = vpop.f32.mrf.mxu0
  %v164 = vadd.f32 %v94, %v163
  %165 = vmatmul.f32.gmra.mxu0 %v140
  %v166 = vpop.f32.mrf.mxu0
  %v167 = vadd.f32 %v95, %v166
  %168 = vdwg.mxu0
  %vm169 = vcmask 130048
  %v170 = vsel %vm169, %v164, -inf
  %171 = vmax.xlane.f32.xlu0 %v170
  %v172 = vpop.xlane.xlu0 %171
  %v173 = vsel %vm169, %v167, -inf
  %174 = vmax.xlane.f32.xlu0 %v173
  %v175 = vpop.xlane.xlu0 %174
  %v176 = vsub.f32 %v164, %v172
  %v177 = vsub.f32 %v167, %v175
  %v178 = vmul.f32 %v176, 1.442695
  %v179 = vpow.pop %v178
  %v180 = vmul.f32 %v177, 1.442695
  %v181 = vpow.pop %v180
  %v182 = vsel %vm169, %v179, 0.0
  %183 = vadd.xlane.f32.xlu0 %v182
  %v184 = vpop.xlane.xlu0 %183
  %v185 = vsel %vm169, %v181, 0.0
  %186 = vadd.xlane.f32.xlu0 %v185
  %v187 = vpop.xlane.xlu0 %186
  %v188 = vrcp.pop %v184
  %v189 = vmul.f32 %v184, %v188
  %v190 = vsub.f32 1.0, %v189
  %v191 = vmul.f32 %v188, %v190
  %v192 = vadd.f32 %v188, %v191
  %vm193 = vweird.f32 %v184
  %vm194 = vweird.f32 %v188
  %vm195 = vmor %vm193, %vm194
  %v196 = vsel %vm195, %v188, %v192
  %v197 = vand.u32 2147483647, %v184
  %vm198 = vcmp.eq.f32.partialorder %v197, 8.507059e+37
  %v199 = vand.u32 %v184, 2147483648
  %v200 = vor.u32 1.1754944e-38, %v199
  %v201 = vsel %vm198, %v200, %v196
  %v202 = vmul.f32 %v179, %v201
  %v203 = vrcp.pop %v187
  %v204 = vmul.f32 %v187, %v203
  %v205 = vsub.f32 1.0, %v204
  %v206 = vmul.f32 %v203, %v205
  %v207 = vadd.f32 %v203, %v206
  %vm208 = vweird.f32 %v187
  %vm209 = vweird.f32 %v203
  %vm210 = vmor %vm208, %vm209
  %v211 = vsel %vm210, %v203, %v207
  %v212 = vand.u32 2147483647, %v187
  %vm213 = vcmp.eq.f32.partialorder %v212, 8.507059e+37
  %v214 = vand.u32 %v187, 2147483648
  %v215 = vor.u32 1.1754944e-38, %v214
  %v216 = vsel %vm213, %v215, %v211
  %v217 = vmul.f32 %v181, %v216
  %218 = vrot.lane.b32.xlu0 %v126, 64
  %v219 = vpop.permute.xlu0 %218
  %220 = vrot.lane.b32.xlu0 %v129, 64
  %v221 = vpop.permute.xlu0 %220
  %v225 = vsel %vm169, %v202, 0
  %v228 = vsel %vm169, %v217, 0
  %230 = vmatpush.msra.mxu0 0.0
  %231 = vmatpush.msra.mxu0 0.0
  %232 = vmatpush.msra.mxu0 0.0
  %233 = vmatpush.msra.mxu0 0.0
  %234 = vmatpush.msra.mxu0 0.0
  %235 = vmatpush.msra.mxu0 0.0
  %236 = vmatpush.msra.mxu0 0.0
  %237 = vmatpush.msra.mxu0 0.0
  %238 = vmatpush.msra.mxu0 0.0
  %239 = vmatpush.msra.mxu0 0.0
  %240 = vmatpush.msra.mxu0 0.0
  %241 = vmatpush.msra.mxu0 0.0
  %242 = vmatpush.msra.mxu0 0.0
  %243 = vmatpush.msra.mxu0 0.0
  %244 = vmatpush.msra.mxu0 %v221
  %245 = vmatpush.msra.mxu0 %v219
  %246 = vmatmul.f32.gmra.mxu0 %v225
  %v247 = vpop.f32.mrf.mxu0
  %v248 = vadd.f32 0.0, %v247
  %249 = vmatmul.f32.gmra.mxu0 %v228
  %v250 = vpop.f32.mrf.mxu0
  %v251 = vadd.f32 0.0, %v250
  %252 = vdwg.mxu0
  %253 = vrot.lane.b32.xlu0 %v126, 120
  %v254 = vpop.permute.xlu0 %253
  %255 = vrot.lane.b32.xlu0 %v129, 120
  %v256 = vpop.permute.xlu0 %255
  %257 = vrot.lane.b32.xlu0 %v126, 88
  %v258 = vpop.permute.xlu0 %257
  %259 = vrot.lane.b32.xlu0 %v129, 88
  %v260 = vpop.permute.xlu0 %259
  %v261 = vsel %vm137, %v254, 0
  %v263 = vsel %vm137, %v256, 0
  %v265 = vsel %vm137, %v258, 0
  %v267 = vsel %vm137, %v260, 0
  %269 = vmatpush.xpose.msra.mxu0 0.0
  %270 = vmatpush.xpose.msra.mxu0 0.0
  %271 = vmatpush.xpose.msra.mxu0 0.0
  %272 = vmatpush.xpose.msra.mxu0 0.0
  %273 = vmatpush.xpose.msra.mxu0 0.0
  %274 = vmatpush.xpose.msra.mxu0 0.0
  %275 = vmatpush.xpose.msra.mxu0 0.0
  %276 = vmatpush.xpose.msra.mxu0 0.0
  %277 = vmatpush.xpose.msra.mxu0 0.0
  %278 = vmatpush.xpose.msra.mxu0 0.0
  %279 = vmatpush.xpose.msra.mxu0 0.0
  %280 = vmatpush.xpose.msra.mxu0 0.0
  %281 = vmatpush.xpose.msra.mxu0 0.0
  %282 = vmatpush.xpose.msra.mxu0 0.0
  %283 = vmatpush.xpose.msra.mxu0 %v267
  %284 = vmatpush.xpose.msra.mxu0 %v265
  %285 = vmatmul.f32.gmra.mxu0 %v261
  %v286 = vpop.f32.mrf.mxu0
  %v287 = vadd.f32 %v94, %v286
  %288 = vmatmul.f32.gmra.mxu0 %v263
  %v289 = vpop.f32.mrf.mxu0
  %v290 = vadd.f32 %v95, %v289
  %291 = vdwg.mxu0
  %v292 = vsel %vm169, %v287, -inf
  %293 = vmax.xlane.f32.xlu0 %v292
  %v294 = vpop.xlane.xlu0 %293
  %v295 = vsel %vm169, %v290, -inf
  %296 = vmax.xlane.f32.xlu0 %v295
  %v297 = vpop.xlane.xlu0 %296
  %v298 = vsub.f32 %v287, %v294
  %v299 = vsub.f32 %v290, %v297
  %v300 = vmul.f32 %v298, 1.442695
  %v301 = vpow.pop %v300
  %v302 = vmul.f32 %v299, 1.442695
  %v303 = vpow.pop %v302
  %v304 = vsel %vm169, %v301, 0.0
  %305 = vadd.xlane.f32.xlu0 %v304
  %v306 = vpop.xlane.xlu0 %305
  %v307 = vsel %vm169, %v303, 0.0
  %308 = vadd.xlane.f32.xlu0 %v307
  %v309 = vpop.xlane.xlu0 %308
  %v310 = vrcp.pop %v306
  %v311 = vmul.f32 %v306, %v310
  %v312 = vsub.f32 1.0, %v311
  %v313 = vmul.f32 %v310, %v312
  %v314 = vadd.f32 %v310, %v313
  %vm315 = vweird.f32 %v306
  %vm316 = vweird.f32 %v310
  %vm317 = vmor %vm315, %vm316
  %v318 = vsel %vm317, %v310, %v314
  %v319 = vand.u32 2147483647, %v306
  %vm320 = vcmp.eq.f32.partialorder %v319, 8.507059e+37
  %v321 = vand.u32 %v306, 2147483648
  %v322 = vor.u32 1.1754944e-38, %v321
  %v323 = vsel %vm320, %v322, %v318
  %v324 = vmul.f32 %v301, %v323
  %v325 = vrcp.pop %v309
  %v326 = vmul.f32 %v309, %v325
  %v327 = vsub.f32 1.0, %v326
  %v328 = vmul.f32 %v325, %v327
  %v329 = vadd.f32 %v325, %v328
  %vm330 = vweird.f32 %v309
  %vm331 = vweird.f32 %v325
  %vm332 = vmor %vm330, %vm331
  %v333 = vsel %vm332, %v325, %v329
  %v334 = vand.u32 2147483647, %v309
  %vm335 = vcmp.eq.f32.partialorder %v334, 8.507059e+37
  %v336 = vand.u32 %v309, 2147483648
  %v337 = vor.u32 1.1754944e-38, %v336
  %v338 = vsel %vm335, %v337, %v333
  %v339 = vmul.f32 %v303, %v338
  %340 = vrot.lane.b32.xlu0 %v126, 56
  %v341 = vpop.permute.xlu0 %340
  %342 = vrot.lane.b32.xlu0 %v129, 56
  %v343 = vpop.permute.xlu0 %342
  %v347 = vsel %vm169, %v324, 0
  %v350 = vsel %vm169, %v339, 0
  %352 = vmatpush.msra.mxu0 0.0
  %353 = vmatpush.msra.mxu0 0.0
  %354 = vmatpush.msra.mxu0 0.0
  %355 = vmatpush.msra.mxu0 0.0
  %356 = vmatpush.msra.mxu0 0.0
  %357 = vmatpush.msra.mxu0 0.0
  %358 = vmatpush.msra.mxu0 0.0
  %359 = vmatpush.msra.mxu0 0.0
  %360 = vmatpush.msra.mxu0 0.0
  %361 = vmatpush.msra.mxu0 0.0
  %362 = vmatpush.msra.mxu0 0.0
  %363 = vmatpush.msra.mxu0 0.0
  %364 = vmatpush.msra.mxu0 0.0
  %365 = vmatpush.msra.mxu0 0.0
  %366 = vmatpush.msra.mxu0 %v343
  %367 = vmatpush.msra.mxu0 %v341
  %368 = vmatmul.f32.gmra.mxu0 %v347
  %v369 = vpop.f32.mrf.mxu0
  %v370 = vadd.f32 0.0, %v369
  %371 = vmatmul.f32.gmra.mxu0 %v350
  %v372 = vpop.f32.mrf.mxu0
  %v373 = vadd.f32 0.0, %v372
  %374 = vdwg.mxu0
  %375 = vrot.lane.b32.xlu0 %v126, 112
  %v376 = vpop.permute.xlu0 %375
  %377 = vrot.lane.b32.xlu0 %v129, 112
  %v378 = vpop.permute.xlu0 %377
  %379 = vrot.lane.b32.xlu0 %v126, 80
  %v380 = vpop.permute.xlu0 %379
  %381 = vrot.lane.b32.xlu0 %v129, 80
  %v382 = vpop.permute.xlu0 %381
  %v383 = vsel %vm137, %v376, 0
  %v385 = vsel %vm137, %v378, 0
  %v387 = vsel %vm137, %v380, 0
  %v389 = vsel %vm137, %v382, 0
  %391 = vmatpush.xpose.msra.mxu0 0.0
  %392 = vmatpush.xpose.msra.mxu0 0.0
  %393 = vmatpush.xpose.msra.mxu0 0.0
  %394 = vmatpush.xpose.msra.mxu0 0.0
  %395 = vmatpush.xpose.msra.mxu0 0.0
  %396 = vmatpush.xpose.msra.mxu0 0.0
  %397 = vmatpush.xpose.msra.mxu0 0.0
  %398 = vmatpush.xpose.msra.mxu0 0.0
  %399 = vmatpush.xpose.msra.mxu0 0.0
  %400 = vmatpush.xpose.msra.mxu0 0.0
  %401 = vmatpush.xpose.msra.mxu0 0.0
  %402 = vmatpush.xpose.msra.mxu0 0.0
  %403 = vmatpush.xpose.msra.mxu0 0.0
  %404 = vmatpush.xpose.msra.mxu0 0.0
  %405 = vmatpush.xpose.msra.mxu0 %v389
  %406 = vmatpush.xpose.msra.mxu0 %v387
  %407 = vmatmul.f32.gmra.mxu0 %v383
  %v408 = vpop.f32.mrf.mxu0
  %v409 = vadd.f32 %v94, %v408
  %410 = vmatmul.f32.gmra.mxu0 %v385
  %v411 = vpop.f32.mrf.mxu0
  %v412 = vadd.f32 %v95, %v411
  %413 = vdwg.mxu0
  %v414 = vsel %vm169, %v409, -inf
  %415 = vmax.xlane.f32.xlu0 %v414
  %v416 = vpop.xlane.xlu0 %415
  %v417 = vsel %vm169, %v412, -inf
  %418 = vmax.xlane.f32.xlu0 %v417
  %v419 = vpop.xlane.xlu0 %418
  %v420 = vsub.f32 %v409, %v416
  %v421 = vsub.f32 %v412, %v419
  %v422 = vmul.f32 %v420, 1.442695
  %v423 = vpow.pop %v422
  %v424 = vmul.f32 %v421, 1.442695
  %v425 = vpow.pop %v424
  %v426 = vsel %vm169, %v423, 0.0
  %427 = vadd.xlane.f32.xlu0 %v426
  %v428 = vpop.xlane.xlu0 %427
  %v429 = vsel %vm169, %v425, 0.0
  %430 = vadd.xlane.f32.xlu0 %v429
  %v431 = vpop.xlane.xlu0 %430
  %v432 = vrcp.pop %v428
  %v433 = vmul.f32 %v428, %v432
  %v434 = vsub.f32 1.0, %v433
  %v435 = vmul.f32 %v432, %v434
  %v436 = vadd.f32 %v432, %v435
  %vm437 = vweird.f32 %v428
  %vm438 = vweird.f32 %v432
  %vm439 = vmor %vm437, %vm438
  %v440 = vsel %vm439, %v432, %v436
  %v441 = vand.u32 2147483647, %v428
  %vm442 = vcmp.eq.f32.partialorder %v441, 8.507059e+37
  %v443 = vand.u32 %v428, 2147483648
  %v444 = vor.u32 1.1754944e-38, %v443
  %v445 = vsel %vm442, %v444, %v440
  %v446 = vmul.f32 %v423, %v445
  %v447 = vrcp.pop %v431
  %v448 = vmul.f32 %v431, %v447
  %v449 = vsub.f32 1.0, %v448
  %v450 = vmul.f32 %v447, %v449
  %v451 = vadd.f32 %v447, %v450
  %vm452 = vweird.f32 %v431
  %vm453 = vweird.f32 %v447
  %vm454 = vmor %vm452, %vm453
  %v455 = vsel %vm454, %v447, %v451
  %v456 = vand.u32 2147483647, %v431
  %vm457 = vcmp.eq.f32.partialorder %v456, 8.507059e+37
  %v458 = vand.u32 %v431, 2147483648
  %v459 = vor.u32 1.1754944e-38, %v458
  %v460 = vsel %vm457, %v459, %v455
  %v461 = vmul.f32 %v425, %v460
  %462 = vrot.lane.b32.xlu0 %v126, 48
  %v463 = vpop.permute.xlu0 %462
  %464 = vrot.lane.b32.xlu0 %v129, 48
  %v465 = vpop.permute.xlu0 %464
  %v469 = vsel %vm169, %v446, 0
  %v472 = vsel %vm169, %v461, 0
  %474 = vmatpush.msra.mxu0 0.0
  %475 = vmatpush.msra.mxu0 0.0
  %476 = vmatpush.msra.mxu0 0.0
  %477 = vmatpush.msra.mxu0 0.0
  %478 = vmatpush.msra.mxu0 0.0
  %479 = vmatpush.msra.mxu0 0.0
  %480 = vmatpush.msra.mxu0 0.0
  %481 = vmatpush.msra.mxu0 0.0
  %482 = vmatpush.msra.mxu0 0.0
  %483 = vmatpush.msra.mxu0 0.0
  %484 = vmatpush.msra.mxu0 0.0
  %485 = vmatpush.msra.mxu0 0.0
  %486 = vmatpush.msra.mxu0 0.0
  %487 = vmatpush.msra.mxu0 0.0
  %488 = vmatpush.msra.mxu0 %v465
  %489 = vmatpush.msra.mxu0 %v463
  %490 = vmatmul.f32.gmra.mxu0 %v469
  %v491 = vpop.f32.mrf.mxu0
  %v492 = vadd.f32 0.0, %v491
  %493 = vmatmul.f32.gmra.mxu0 %v472
  %v494 = vpop.f32.mrf.mxu0
  %v495 = vadd.f32 0.0, %v494
  %496 = vdwg.mxu0
  %497 = vrot.lane.b32.xlu0 %v126, 104
  %v498 = vpop.permute.xlu0 %497
  %499 = vrot.lane.b32.xlu0 %v129, 104
  %v500 = vpop.permute.xlu0 %499
  %501 = vrot.lane.b32.xlu0 %v126, 72
  %v502 = vpop.permute.xlu0 %501
  %503 = vrot.lane.b32.xlu0 %v129, 72
  %v504 = vpop.permute.xlu0 %503
  %v505 = vsel %vm137, %v498, 0
  %v507 = vsel %vm137, %v500, 0
  %v509 = vsel %vm137, %v502, 0
  %v511 = vsel %vm137, %v504, 0
  %513 = vmatpush.xpose.msra.mxu0 0.0
  %514 = vmatpush.xpose.msra.mxu0 0.0
  %515 = vmatpush.xpose.msra.mxu0 0.0
  %516 = vmatpush.xpose.msra.mxu0 0.0
  %517 = vmatpush.xpose.msra.mxu0 0.0
  %518 = vmatpush.xpose.msra.mxu0 0.0
  %519 = vmatpush.xpose.msra.mxu0 0.0
  %520 = vmatpush.xpose.msra.mxu0 0.0
  %521 = vmatpush.xpose.msra.mxu0 0.0
  %522 = vmatpush.xpose.msra.mxu0 0.0
  %523 = vmatpush.xpose.msra.mxu0 0.0
  %524 = vmatpush.xpose.msra.mxu0 0.0
  %525 = vmatpush.xpose.msra.mxu0 0.0
  %526 = vmatpush.xpose.msra.mxu0 0.0
  %527 = vmatpush.xpose.msra.mxu0 %v511
  %528 = vmatpush.xpose.msra.mxu0 %v509
  %529 = vmatmul.f32.gmra.mxu0 %v505
  %v530 = vpop.f32.mrf.mxu0
  %v531 = vadd.f32 %v94, %v530
  %532 = vmatmul.f32.gmra.mxu0 %v507
  %v533 = vpop.f32.mrf.mxu0
  %v534 = vadd.f32 %v95, %v533
  %535 = vdwg.mxu0
  %v536 = vsel %vm169, %v531, -inf
  %537 = vmax.xlane.f32.xlu0 %v536
  %v538 = vpop.xlane.xlu0 %537
  %v539 = vsel %vm169, %v534, -inf
  %540 = vmax.xlane.f32.xlu0 %v539
  %v541 = vpop.xlane.xlu0 %540
  %v542 = vsub.f32 %v531, %v538
  %v543 = vsub.f32 %v534, %v541
  %v544 = vmul.f32 %v542, 1.442695
  %v545 = vpow.pop %v544
  %v546 = vmul.f32 %v543, 1.442695
  %v547 = vpow.pop %v546
  %v548 = vsel %vm169, %v545, 0.0
  %549 = vadd.xlane.f32.xlu0 %v548
  %v550 = vpop.xlane.xlu0 %549
  %v551 = vsel %vm169, %v547, 0.0
  %552 = vadd.xlane.f32.xlu0 %v551
  %v553 = vpop.xlane.xlu0 %552
  %v554 = vrcp.pop %v550
  %v555 = vmul.f32 %v550, %v554
  %v556 = vsub.f32 1.0, %v555
  %v557 = vmul.f32 %v554, %v556
  %v558 = vadd.f32 %v554, %v557
  %vm559 = vweird.f32 %v550
  %vm560 = vweird.f32 %v554
  %vm561 = vmor %vm559, %vm560
  %v562 = vsel %vm561, %v554, %v558
  %v563 = vand.u32 2147483647, %v550
  %vm564 = vcmp.eq.f32.partialorder %v563, 8.507059e+37
  %v565 = vand.u32 %v550, 2147483648
  %v566 = vor.u32 1.1754944e-38, %v565
  %v567 = vsel %vm564, %v566, %v562
  %v568 = vmul.f32 %v545, %v567
  %v569 = vrcp.pop %v553
  %v570 = vmul.f32 %v553, %v569
  %v571 = vsub.f32 1.0, %v570
  %v572 = vmul.f32 %v569, %v571
  %v573 = vadd.f32 %v569, %v572
  %vm574 = vweird.f32 %v553
  %vm575 = vweird.f32 %v569
  %vm576 = vmor %vm574, %vm575
  %v577 = vsel %vm576, %v569, %v573
  %v578 = vand.u32 2147483647, %v553
  %vm579 = vcmp.eq.f32.partialorder %v578, 8.507059e+37
  %v580 = vand.u32 %v553, 2147483648
  %v581 = vor.u32 1.1754944e-38, %v580
  %v582 = vsel %vm579, %v581, %v577
  %v583 = vmul.f32 %v547, %v582
  %584 = vrot.lane.b32.xlu0 %v126, 40
  %v585 = vpop.permute.xlu0 %584
  %586 = vrot.lane.b32.xlu0 %v129, 40
  %v587 = vpop.permute.xlu0 %586
  %v591 = vsel %vm169, %v568, 0
  %v594 = vsel %vm169, %v583, 0
  %596 = vmatpush.msra.mxu0 0.0
  %597 = vmatpush.msra.mxu0 0.0
  %598 = vmatpush.msra.mxu0 0.0
  %599 = vmatpush.msra.mxu0 0.0
  %600 = vmatpush.msra.mxu0 0.0
  %601 = vmatpush.msra.mxu0 0.0
  %602 = vmatpush.msra.mxu0 0.0
  %603 = vmatpush.msra.mxu0 0.0
  %604 = vmatpush.msra.mxu0 0.0
  %605 = vmatpush.msra.mxu0 0.0
  %606 = vmatpush.msra.mxu0 0.0
  %607 = vmatpush.msra.mxu0 0.0
  %608 = vmatpush.msra.mxu0 0.0
  %609 = vmatpush.msra.mxu0 0.0
  %610 = vmatpush.msra.mxu0 %v587
  %611 = vmatpush.msra.mxu0 %v585
  %612 = vmatmul.f32.gmra.mxu0 %v591
  %v613 = vpop.f32.mrf.mxu0
  %v614 = vadd.f32 0.0, %v613
  %615 = vmatmul.f32.gmra.mxu0 %v594
  %v616 = vpop.f32.mrf.mxu0
  %v617 = vadd.f32 0.0, %v616
  %618 = vdwg.mxu0
  %621 = vrot.lane.b32.xlu0 %v370, 8
  %v622 = vpop.permute.xlu0 %621
  %623 = vrot.lane.b32.xlu0 %v373, 8
  %v624 = vpop.permute.xlu0 %623
  %629 = vrot.lane.b32.xlu0 %v492, 16
  %v630 = vpop.permute.xlu0 %629
  %631 = vrot.lane.b32.xlu0 %v495, 16
  %v632 = vpop.permute.xlu0 %631
  %637 = vrot.lane.b32.xlu0 %v614, 24
  %v638 = vpop.permute.xlu0 %637
  %639 = vrot.lane.b32.xlu0 %v617, 24
  %v640 = vpop.permute.xlu0 %639
  %v643 = vsel %vm137, %v248, %v622
  %v644 = vsel %vm137, %v251, %v624
  %v645 = vsel %vm169, %v643, %v630
  %v646 = vsel %vm169, %v644, %v632
  %vm647 = vcmask 195584
  %v648 = vsel %vm647, %v645, %v638
  %v649 = vsel %vm647, %v646, %v640
  %v650 = vld [vmem:[%s4] sm:$0xff]
  %v651 = vld [vmem:[%s4 + $0x8] sm:$0xff]
  %v652 = vld [vmem:[%s4 + $0x10] sm:$0xff]
  %v653 = vld [vmem:[%s4 + $0x18] sm:$0xff]
  %v654 = vld [vmem:[%s2 + $0x5] sm:$0x1]
  %v655 = vperm.slane %v654, 0
  %v657 = vsel %vm36, %v648, 0
  %v660 = vsel %vm36, %v649, 0
  %662 = vmatpush.msra.mxu0 0.0
  %663 = vmatpush.msra.mxu0 0.0
  %664 = vmatpush.msra.mxu0 0.0
  %665 = vmatpush.msra.mxu0 0.0
  %666 = vmatpush.msra.mxu0 0.0
  %667 = vmatpush.msra.mxu0 0.0
  %668 = vmatpush.msra.mxu0 0.0
  %669 = vmatpush.msra.mxu0 0.0
  %670 = vmatpush.msra.mxu0 0.0
  %671 = vmatpush.msra.mxu0 0.0
  %672 = vmatpush.msra.mxu0 0.0
  %673 = vmatpush.msra.mxu0 0.0
  %674 = vmatpush.msra.mxu0 %v653
  %675 = vmatpush.msra.mxu0 %v652
  %676 = vmatpush.msra.mxu0 %v651
  %677 = vmatpush.msra.mxu0 %v650
  %678 = vmatmul.f32.gmra.mxu0 %v657
  %v679 = vpop.f32.mrf.mxu0
  %v680 = vadd.f32 %v655, %v679
  %681 = vmatmul.f32.gmra.mxu0 %v660
  %v682 = vpop.f32.mrf.mxu0
  %v683 = vadd.f32 %v655, %v682
  %684 = vdwg.mxu0
  %v685 = vadd.f32 %v680, %v92
  %v686 = vadd.f32 %v683, %v93
  %v687 = vld [vmem:[%s2 + $0x6] sm:$0x1]
  %v688 = vld [vmem:[%s2 + $0x7] sm:$0x1]
  %v689 = vsel %vm36, %v685, 0.0
  %690 = vadd.xlane.f32.xlu0 %v689
  %v691 = vpop.xlane.xlu0 %690
  %v692 = vsel %vm36, %v686, 0.0
  %693 = vadd.xlane.f32.xlu0 %v692
  %v694 = vpop.xlane.xlu0 %693
  %v695 = vmul.f32 %v691, %v49
  %v696 = vmul.f32 %v694, %v49
  %v697 = vsub.f32 %v685, %v695
  %v698 = vsub.f32 %v686, %v696
  %v699 = vmul.f32 %v697, %v697
  %v700 = vmul.f32 %v698, %v698
  %v701 = vsel %vm36, %v699, 0.0
  %702 = vadd.xlane.f32.xlu0 %v701
  %v703 = vpop.xlane.xlu0 %702
  %v704 = vsel %vm36, %v700, 0.0
  %705 = vadd.xlane.f32.xlu0 %v704
  %v706 = vpop.xlane.xlu0 %705
  %v707 = vmul.f32 %v703, %v49
  %v708 = vmul.f32 %v706, %v49
  %v709 = vadd.f32 %v707, 1e-12
  %v710 = vadd.f32 %v708, 1e-12
  %v711 = vrsqrt.pop %v709
  %v712 = vmul.f32 %v711, %v709
  %v713 = vmul.f32 %v712, %v711
  %v714 = vmul.f32 0.5, %v713
  %v715 = vsub.f32 1.5, %v714
  %v716 = vmul.f32 %v711, %v715
  %vm717 = vweird.f32 %v709
  %vm718 = vweird.f32 %v711
  %vm719 = vmor %vm717, %vm718
  %v720 = vsel %vm719, %v711, %v716
  %v721 = vrsqrt.pop %v710
  %v722 = vmul.f32 %v721, %v710
  %v723 = vmul.f32 %v722, %v721
  %v724 = vmul.f32 0.5, %v723
  %v725 = vsub.f32 1.5, %v724
  %v726 = vmul.f32 %v721, %v725
  %vm727 = vweird.f32 %v710
  %vm728 = vweird.f32 %v721
  %vm729 = vmor %vm727, %vm728
  %v730 = vsel %vm729, %v721, %v726
  %v731 = vmul.f32 %v697, %v720
  %v732 = vmul.f32 %v698, %v730
  %v733 = vperm.slane %v687, 0
  %v734 = vmul.f32 %v731, %v733
  %v735 = vmul.f32 %v732, %v733
  %v736 = vperm.slane %v688, 0
  %v737 = vadd.f32 %v734, %v736
  %v738 = vadd.f32 %v735, %v736
  %v739 = vld [vmem:[%s5] sm:$0xff]
  %v740 = vld [vmem:[%s5 + $0x8] sm:$0xff]
  %v741 = vld [vmem:[%s5 + $0x10] sm:$0xff]
  %v742 = vld [vmem:[%s5 + $0x18] sm:$0xff]
  %v743 = vld [vmem:[%s2 + $0x8] sm:$0x1]
  %v744 = vperm.slane %v743, 0
  %v746 = vsel %vm36, %v737, 0
  %v749 = vsel %vm36, %v738, 0
  %751 = vmatpush.msra.mxu0 0.0
  %752 = vmatpush.msra.mxu0 0.0
  %753 = vmatpush.msra.mxu0 0.0
  %754 = vmatpush.msra.mxu0 0.0
  %755 = vmatpush.msra.mxu0 0.0
  %756 = vmatpush.msra.mxu0 0.0
  %757 = vmatpush.msra.mxu0 0.0
  %758 = vmatpush.msra.mxu0 0.0
  %759 = vmatpush.msra.mxu0 0.0
  %760 = vmatpush.msra.mxu0 0.0
  %761 = vmatpush.msra.mxu0 0.0
  %762 = vmatpush.msra.mxu0 0.0
  %763 = vmatpush.msra.mxu0 %v742
  %764 = vmatpush.msra.mxu0 %v741
  %765 = vmatpush.msra.mxu0 %v740
  %766 = vmatpush.msra.mxu0 %v739
  %767 = vmatmul.f32.gmra.mxu0 %v746
  %v768 = vpop.f32.mrf.mxu0
  %v769 = vadd.f32 %v744, %v768
  %770 = vmatmul.f32.gmra.mxu0 %v749
  %v771 = vpop.f32.mrf.mxu0
  %v772 = vadd.f32 %v744, %v771
  %773 = vdwg.mxu0
  %v774 = vmul.f32 %v769, 0.5
  %v775 = vmul.f32 %v772, 0.5
  %v776 = vmul.f32 %v769, 0.70710677
  %v777 = vmul.f32 %v772, 0.70710677
  %v778 = vmul.f32 %v776, %v776
  %v779 = vmin.f32 16.0, %v778
  %v780 = vmul.f32 %v779, 2.1237322e-06
  %v781 = vadd.f32 %v780, 0.00028619796
  %v782 = vmul.f32 %v779, %v781
  %v783 = vadd.f32 %v782, 0.0036580483
  %v784 = vmul.f32 %v779, %v783
  %v785 = vadd.f32 %v784, 0.05243302
  %v786 = vmul.f32 %v779, %v785
  %v787 = vadd.f32 %v786, 0.18741608
  %v788 = vmul.f32 %v779, %v787
  %v789 = vadd.f32 %v788, 1.1283791
  %v790 = vmul.f32 %v776, %v789
  %v791 = vmul.f32 %v779, 3.8918573e-05
  %v792 = vadd.f32 %v791, 0.001143296
  %v793 = vmul.f32 %v779, %v792
  %v794 = vadd.f32 %v793, 0.014752088
  %v795 = vmul.f32 %v779, %v794
  %v796 = vadd.f32 %v795, 0.112945676
  %v797 = vmul.f32 %v779, %v796
  %v798 = vadd.f32 %v797, 0.4994258
  %v799 = vmul.f32 %v779, %v798
  %v800 = vadd.f32 %v799, 1.0
  %v801 = vrcp.pop %v800
  %v802 = vmul.f32 %v800, %v801
  %v803 = vsub.f32 1.0, %v802
  %v804 = vmul.f32 %v801, %v803
  %v805 = vadd.f32 %v801, %v804
  %vm806 = vweird.f32 %v800
  %vm807 = vweird.f32 %v801
  %vm808 = vmor %vm806, %vm807
  %v809 = vsel %vm808, %v801, %v805
  %v810 = vand.u32 2147483647, %v800
  %vm811 = vcmp.eq.f32.partialorder %v810, 8.507059e+37
  %v812 = vand.u32 %v800, 2147483648
  %v813 = vor.u32 1.1754944e-38, %v812
  %v814 = vsel %vm811, %v813, %v809
  %v815 = vmul.f32 %v790, %v814
  %v816 = vmin.f32 %v815, 1.0
  %v817 = vmax.f32 %v816, -1.0
  %v818 = vmul.f32 %v777, %v777
  %v819 = vmin.f32 16.0, %v818
  %v820 = vmul.f32 %v819, 2.1237322e-06
  %v821 = vadd.f32 %v820, 0.00028619796
  %v822 = vmul.f32 %v819, %v821
  %v823 = vadd.f32 %v822, 0.0036580483
  %v824 = vmul.f32 %v819, %v823
  %v825 = vadd.f32 %v824, 0.05243302
  %v826 = vmul.f32 %v819, %v825
  %v827 = vadd.f32 %v826, 0.18741608
  %v828 = vmul.f32 %v819, %v827
  %v829 = vadd.f32 %v828, 1.1283791
  %v830 = vmul.f32 %v777, %v829
  %v831 = vmul.f32 %v819, 3.8918573e-05
  %v832 = vadd.f32 %v831, 0.001143296
  %v833 = vmul.f32 %v819, %v832
  %v834 = vadd.f32 %v833, 0.014752088
  %v835 = vmul.f32 %v819, %v834
  %v836 = vadd.f32 %v835, 0.112945676
  %v837 = vmul.f32 %v819, %v836
  %v838 = vadd.f32 %v837, 0.4994258
  %v839 = vmul.f32 %v819, %v838
  %v840 = vadd.f32 %v839, 1.0
  %v841 = vrcp.pop %v840
  %v842 = vmul.f32 %v840, %v841
  %v843 = vsub.f32 1.0, %v842
  %v844 = vmul.f32 %v841, %v843
  %v845 = vadd.f32 %v841, %v844
  %vm846 = vweird.f32 %v840
  %vm847 = vweird.f32 %v841
  %vm848 = vmor %vm846, %vm847
  %v849 = vsel %vm848, %v841, %v845
  %v850 = vand.u32 2147483647, %v840
  %vm851 = vcmp.eq.f32.partialorder %v850, 8.507059e+37
  %v852 = vand.u32 %v840, 2147483648
  %v853 = vor.u32 1.1754944e-38, %v852
  %v854 = vsel %vm851, %v853, %v849
  %v855 = vmul.f32 %v830, %v854
  %v856 = vmin.f32 %v855, 1.0
  %v857 = vmax.f32 %v856, -1.0
  %v858 = vadd.f32 %v817, 1.0
  %v859 = vadd.f32 %v857, 1.0
  %v860 = vmul.f32 %v774, %v858
  %v861 = vmul.f32 %v775, %v859
  %v862 = vld [vmem:[%s6] sm:$0xff]
  %v863 = vld [vmem:[%s6 + $0x8] sm:$0xff]
  %v864 = vld [vmem:[%s6 + $0x10] sm:$0xff]
  %v865 = vld [vmem:[%s6 + $0x18] sm:$0xff]
  %v866 = vld [vmem:[%s6 + $0x20] sm:$0xff]
  %v867 = vld [vmem:[%s6 + $0x28] sm:$0xff]
  %v868 = vld [vmem:[%s6 + $0x30] sm:$0xff]
  %v869 = vld [vmem:[%s6 + $0x38] sm:$0xff]
  %v870 = vld [vmem:[%s2 + $0x9] sm:$0x1]
  %v871 = vperm.slane %v870, 0
  %vm872 = vcmask 523264
  %v874 = vsel %vm872, %v860, 0
  %v877 = vsel %vm872, %v861, 0
  %879 = vmatpush.msra.mxu0 0.0
  %880 = vmatpush.msra.mxu0 0.0
  %881 = vmatpush.msra.mxu0 0.0
  %882 = vmatpush.msra.mxu0 0.0
  %883 = vmatpush.msra.mxu0 0.0
  %884 = vmatpush.msra.mxu0 0.0
  %885 = vmatpush.msra.mxu0 0.0
  %886 = vmatpush.msra.mxu0 0.0
  %887 = vmatpush.msra.mxu0 %v869
  %888 = vmatpush.msra.mxu0 %v868
  %889 = vmatpush.msra.mxu0 %v867
  %890 = vmatpush.msra.mxu0 %v866
  %891 = vmatpush.msra.mxu0 %v865
  %892 = vmatpush.msra.mxu0 %v864
  %893 = vmatpush.msra.mxu0 %v863
  %894 = vmatpush.msra.mxu0 %v862
  %895 = vmatmul.f32.gmra.mxu0 %v874
  %v896 = vpop.f32.mrf.mxu0
  %v897 = vadd.f32 %v871, %v896
  %898 = vmatmul.f32.gmra.mxu0 %v877
  %v899 = vpop.f32.mrf.mxu0
  %v900 = vadd.f32 %v871, %v899
  %901 = vdwg.mxu0
  %v902 = vadd.f32 %v897, %v737
  %v903 = vadd.f32 %v900, %v738
  %v904 = vld [vmem:[%s2 + $0xa] sm:$0x1]
  %v905 = vld [vmem:[%s2 + $0xb] sm:$0x1]
  %v906 = vsel %vm36, %v902, 0.0
  %907 = vadd.xlane.f32.xlu0 %v906
  %v908 = vpop.xlane.xlu0 %907
  %v909 = vsel %vm36, %v903, 0.0
  %910 = vadd.xlane.f32.xlu0 %v909
  %v911 = vpop.xlane.xlu0 %910
  %v912 = vmul.f32 %v908, %v49
  %v913 = vmul.f32 %v911, %v49
  %v914 = vsub.f32 %v902, %v912
  %v915 = vsub.f32 %v903, %v913
  %v916 = vmul.f32 %v914, %v914
  %v917 = vmul.f32 %v915, %v915
  %v918 = vsel %vm36, %v916, 0.0
  %919 = vadd.xlane.f32.xlu0 %v918
  %v920 = vpop.xlane.xlu0 %919
  %v921 = vsel %vm36, %v917, 0.0
  %922 = vadd.xlane.f32.xlu0 %v921
  %v923 = vpop.xlane.xlu0 %922
  %v924 = vmul.f32 %v920, %v49
  %v925 = vmul.f32 %v923, %v49
  %v926 = vadd.f32 %v924, 1e-12
  %v927 = vadd.f32 %v925, 1e-12
  %v928 = vrsqrt.pop %v926
  %v929 = vmul.f32 %v928, %v926
  %v930 = vmul.f32 %v929, %v928
  %v931 = vmul.f32 0.5, %v930
  %v932 = vsub.f32 1.5, %v931
  %v933 = vmul.f32 %v928, %v932
  %vm934 = vweird.f32 %v926
  %vm935 = vweird.f32 %v928
  %vm936 = vmor %vm934, %vm935
  %v937 = vsel %vm936, %v928, %v933
  %v938 = vrsqrt.pop %v927
  %v939 = vmul.f32 %v938, %v927
  %v940 = vmul.f32 %v939, %v938
  %v941 = vmul.f32 0.5, %v940
  %v942 = vsub.f32 1.5, %v941
  %v943 = vmul.f32 %v938, %v942
  %vm944 = vweird.f32 %v927
  %vm945 = vweird.f32 %v938
  %vm946 = vmor %vm944, %vm945
  %v947 = vsel %vm946, %v938, %v943
  %v948 = vmul.f32 %v914, %v937
  %v949 = vmul.f32 %v915, %v947
  %v950 = vperm.slane %v904, 0
  %v951 = vmul.f32 %v948, %v950
  %v952 = vmul.f32 %v949, %v950
  %v953 = vperm.slane %v905, 0
  %v954 = vadd.f32 %v951, %v953
  %v955 = vadd.f32 %v952, %v953
  %s956 = scalar_lea.vmem %s3, 32
  %v957 = vld [vmem:[%s956] sm:$0xff]
  %v958 = vld [vmem:[%s956 + $0x8] sm:$0xff]
  %v959 = vld [vmem:[%s956 + $0x10] sm:$0xff]
  %v960 = vld [vmem:[%s956 + $0x18] sm:$0xff]
  %v961 = vld [vmem:[%s2 + $0xc] sm:$0x1]
  %v962 = vperm.slane %v961, 0
  %v964 = vsel %vm36, %v954, 0
  %v967 = vsel %vm36, %v955, 0
  %969 = vmatpush.msra.mxu0 0.0
  %970 = vmatpush.msra.mxu0 0.0
  %971 = vmatpush.msra.mxu0 0.0
  %972 = vmatpush.msra.mxu0 0.0
  %973 = vmatpush.msra.mxu0 0.0
  %974 = vmatpush.msra.mxu0 0.0
  %975 = vmatpush.msra.mxu0 0.0
  %976 = vmatpush.msra.mxu0 0.0
  %977 = vmatpush.msra.mxu0 0.0
  %978 = vmatpush.msra.mxu0 0.0
  %979 = vmatpush.msra.mxu0 0.0
  %980 = vmatpush.msra.mxu0 0.0
  %981 = vmatpush.msra.mxu0 %v960
  %982 = vmatpush.msra.mxu0 %v959
  %983 = vmatpush.msra.mxu0 %v958
  %984 = vmatpush.msra.mxu0 %v957
  %985 = vmatmul.f32.gmra.mxu0 %v964
  %v986 = vpop.f32.mrf.mxu0
  %v987 = vadd.f32 %v962, %v986
  %988 = vmatmul.f32.gmra.mxu0 %v967
  %v989 = vpop.f32.mrf.mxu0
  %v990 = vadd.f32 %v962, %v989
  %991 = vdwg.mxu0
  %994 = vrot.lane.b32.xlu0 %v987, 96
  %v995 = vpop.permute.xlu0 %994
  %996 = vrot.lane.b32.xlu0 %v990, 96
  %v997 = vpop.permute.xlu0 %996
  %v998 = vsel %vm137, %v987, 0
  %v1000 = vsel %vm137, %v990, 0
  %v1002 = vsel %vm137, %v995, 0
  %v1004 = vsel %vm137, %v997, 0
  %1006 = vmatpush.xpose.msra.mxu0 0.0
  %1007 = vmatpush.xpose.msra.mxu0 0.0
  %1008 = vmatpush.xpose.msra.mxu0 0.0
  %1009 = vmatpush.xpose.msra.mxu0 0.0
  %1010 = vmatpush.xpose.msra.mxu0 0.0
  %1011 = vmatpush.xpose.msra.mxu0 0.0
  %1012 = vmatpush.xpose.msra.mxu0 0.0
  %1013 = vmatpush.xpose.msra.mxu0 0.0
  %1014 = vmatpush.xpose.msra.mxu0 0.0
  %1015 = vmatpush.xpose.msra.mxu0 0.0
  %1016 = vmatpush.xpose.msra.mxu0 0.0
  %1017 = vmatpush.xpose.msra.mxu0 0.0
  %1018 = vmatpush.xpose.msra.mxu0 0.0
  %1019 = vmatpush.xpose.msra.mxu0 0.0
  %1020 = vmatpush.xpose.msra.mxu0 %v1004
  %1021 = vmatpush.xpose.msra.mxu0 %v1002
  %1022 = vmatmul.f32.gmra.mxu0 %v998
  %v1023 = vpop.f32.mrf.mxu0
  %v1024 = vadd.f32 %v94, %v1023
  %1025 = vmatmul.f32.gmra.mxu0 %v1000
  %v1026 = vpop.f32.mrf.mxu0
  %v1027 = vadd.f32 %v95, %v1026
  %1028 = vdwg.mxu0
  %v1029 = vsel %vm169, %v1024, -inf
  %1030 = vmax.xlane.f32.xlu0 %v1029
  %v1031 = vpop.xlane.xlu0 %1030
  %v1032 = vsel %vm169, %v1027, -inf
  %1033 = vmax.xlane.f32.xlu0 %v1032
  %v1034 = vpop.xlane.xlu0 %1033
  %v1035 = vsub.f32 %v1024, %v1031
  %v1036 = vsub.f32 %v1027, %v1034
  %v1037 = vmul.f32 %v1035, 1.442695
  %v1038 = vpow.pop %v1037
  %v1039 = vmul.f32 %v1036, 1.442695
  %v1040 = vpow.pop %v1039
  %v1041 = vsel %vm169, %v1038, 0.0
  %1042 = vadd.xlane.f32.xlu0 %v1041
  %v1043 = vpop.xlane.xlu0 %1042
  %v1044 = vsel %vm169, %v1040, 0.0
  %1045 = vadd.xlane.f32.xlu0 %v1044
  %v1046 = vpop.xlane.xlu0 %1045
  %v1047 = vrcp.pop %v1043
  %v1048 = vmul.f32 %v1043, %v1047
  %v1049 = vsub.f32 1.0, %v1048
  %v1050 = vmul.f32 %v1047, %v1049
  %v1051 = vadd.f32 %v1047, %v1050
  %vm1052 = vweird.f32 %v1043
  %vm1053 = vweird.f32 %v1047
  %vm1054 = vmor %vm1052, %vm1053
  %v1055 = vsel %vm1054, %v1047, %v1051
  %v1056 = vand.u32 2147483647, %v1043
  %vm1057 = vcmp.eq.f32.partialorder %v1056, 8.507059e+37
  %v1058 = vand.u32 %v1043, 2147483648
  %v1059 = vor.u32 1.1754944e-38, %v1058
  %v1060 = vsel %vm1057, %v1059, %v1055
  %v1061 = vmul.f32 %v1038, %v1060
  %v1062 = vrcp.pop %v1046
  %v1063 = vmul.f32 %v1046, %v1062
  %v1064 = vsub.f32 1.0, %v1063
  %v1065 = vmul.f32 %v1062, %v1064
  %v1066 = vadd.f32 %v1062, %v1065
  %vm1067 = vweird.f32 %v1046
  %vm1068 = vweird.f32 %v1062
  %vm1069 = vmor %vm1067, %vm1068
  %v1070 = vsel %vm1069, %v1062, %v1066
  %v1071 = vand.u32 2147483647, %v1046
  %vm1072 = vcmp.eq.f32.partialorder %v1071, 8.507059e+37
  %v1073 = vand.u32 %v1046, 2147483648
  %v1074 = vor.u32 1.1754944e-38, %v1073
  %v1075 = vsel %vm1072, %v1074, %v1070
  %v1076 = vmul.f32 %v1040, %v1075
  %1077 = vrot.lane.b32.xlu0 %v987, 64
  %v1078 = vpop.permute.xlu0 %1077
  %1079 = vrot.lane.b32.xlu0 %v990, 64
  %v1080 = vpop.permute.xlu0 %1079
  %v1084 = vsel %vm169, %v1061, 0
  %v1087 = vsel %vm169, %v1076, 0
  %1089 = vmatpush.msra.mxu0 0.0
  %1090 = vmatpush.msra.mxu0 0.0
  %1091 = vmatpush.msra.mxu0 0.0
  %1092 = vmatpush.msra.mxu0 0.0
  %1093 = vmatpush.msra.mxu0 0.0
  %1094 = vmatpush.msra.mxu0 0.0
  %1095 = vmatpush.msra.mxu0 0.0
  %1096 = vmatpush.msra.mxu0 0.0
  %1097 = vmatpush.msra.mxu0 0.0
  %1098 = vmatpush.msra.mxu0 0.0
  %1099 = vmatpush.msra.mxu0 0.0
  %1100 = vmatpush.msra.mxu0 0.0
  %1101 = vmatpush.msra.mxu0 0.0
  %1102 = vmatpush.msra.mxu0 0.0
  %1103 = vmatpush.msra.mxu0 %v1080
  %1104 = vmatpush.msra.mxu0 %v1078
  %1105 = vmatmul.f32.gmra.mxu0 %v1084
  %v1106 = vpop.f32.mrf.mxu0
  %v1107 = vadd.f32 0.0, %v1106
  %1108 = vmatmul.f32.gmra.mxu0 %v1087
  %v1109 = vpop.f32.mrf.mxu0
  %v1110 = vadd.f32 0.0, %v1109
  %1111 = vdwg.mxu0
  %1112 = vrot.lane.b32.xlu0 %v987, 120
  %v1113 = vpop.permute.xlu0 %1112
  %1114 = vrot.lane.b32.xlu0 %v990, 120
  %v1115 = vpop.permute.xlu0 %1114
  %1116 = vrot.lane.b32.xlu0 %v987, 88
  %v1117 = vpop.permute.xlu0 %1116
  %1118 = vrot.lane.b32.xlu0 %v990, 88
  %v1119 = vpop.permute.xlu0 %1118
  %v1120 = vsel %vm137, %v1113, 0
  %v1122 = vsel %vm137, %v1115, 0
  %v1124 = vsel %vm137, %v1117, 0
  %v1126 = vsel %vm137, %v1119, 0
  %1128 = vmatpush.xpose.msra.mxu0 0.0
  %1129 = vmatpush.xpose.msra.mxu0 0.0
  %1130 = vmatpush.xpose.msra.mxu0 0.0
  %1131 = vmatpush.xpose.msra.mxu0 0.0
  %1132 = vmatpush.xpose.msra.mxu0 0.0
  %1133 = vmatpush.xpose.msra.mxu0 0.0
  %1134 = vmatpush.xpose.msra.mxu0 0.0
  %1135 = vmatpush.xpose.msra.mxu0 0.0
  %1136 = vmatpush.xpose.msra.mxu0 0.0
  %1137 = vmatpush.xpose.msra.mxu0 0.0
  %1138 = vmatpush.xpose.msra.mxu0 0.0
  %1139 = vmatpush.xpose.msra.mxu0 0.0
  %1140 = vmatpush.xpose.msra.mxu0 0.0
  %1141 = vmatpush.xpose.msra.mxu0 0.0
  %1142 = vmatpush.xpose.msra.mxu0 %v1126
  %1143 = vmatpush.xpose.msra.mxu0 %v1124
  %1144 = vmatmul.f32.gmra.mxu0 %v1120
  %v1145 = vpop.f32.mrf.mxu0
  %v1146 = vadd.f32 %v94, %v1145
  %1147 = vmatmul.f32.gmra.mxu0 %v1122
  %v1148 = vpop.f32.mrf.mxu0
  %v1149 = vadd.f32 %v95, %v1148
  %1150 = vdwg.mxu0
  %v1151 = vsel %vm169, %v1146, -inf
  %1152 = vmax.xlane.f32.xlu0 %v1151
  %v1153 = vpop.xlane.xlu0 %1152
  %v1154 = vsel %vm169, %v1149, -inf
  %1155 = vmax.xlane.f32.xlu0 %v1154
  %v1156 = vpop.xlane.xlu0 %1155
  %v1157 = vsub.f32 %v1146, %v1153
  %v1158 = vsub.f32 %v1149, %v1156
  %v1159 = vmul.f32 %v1157, 1.442695
  %v1160 = vpow.pop %v1159
  %v1161 = vmul.f32 %v1158, 1.442695
  %v1162 = vpow.pop %v1161
  %v1163 = vsel %vm169, %v1160, 0.0
  %1164 = vadd.xlane.f32.xlu0 %v1163
  %v1165 = vpop.xlane.xlu0 %1164
  %v1166 = vsel %vm169, %v1162, 0.0
  %1167 = vadd.xlane.f32.xlu0 %v1166
  %v1168 = vpop.xlane.xlu0 %1167
  %v1169 = vrcp.pop %v1165
  %v1170 = vmul.f32 %v1165, %v1169
  %v1171 = vsub.f32 1.0, %v1170
  %v1172 = vmul.f32 %v1169, %v1171
  %v1173 = vadd.f32 %v1169, %v1172
  %vm1174 = vweird.f32 %v1165
  %vm1175 = vweird.f32 %v1169
  %vm1176 = vmor %vm1174, %vm1175
  %v1177 = vsel %vm1176, %v1169, %v1173
  %v1178 = vand.u32 2147483647, %v1165
  %vm1179 = vcmp.eq.f32.partialorder %v1178, 8.507059e+37
  %v1180 = vand.u32 %v1165, 2147483648
  %v1181 = vor.u32 1.1754944e-38, %v1180
  %v1182 = vsel %vm1179, %v1181, %v1177
  %v1183 = vmul.f32 %v1160, %v1182
  %v1184 = vrcp.pop %v1168
  %v1185 = vmul.f32 %v1168, %v1184
  %v1186 = vsub.f32 1.0, %v1185
  %v1187 = vmul.f32 %v1184, %v1186
  %v1188 = vadd.f32 %v1184, %v1187
  %vm1189 = vweird.f32 %v1168
  %vm1190 = vweird.f32 %v1184
  %vm1191 = vmor %vm1189, %vm1190
  %v1192 = vsel %vm1191, %v1184, %v1188
  %v1193 = vand.u32 2147483647, %v1168
  %vm1194 = vcmp.eq.f32.partialorder %v1193, 8.507059e+37
  %v1195 = vand.u32 %v1168, 2147483648
  %v1196 = vor.u32 1.1754944e-38, %v1195
  %v1197 = vsel %vm1194, %v1196, %v1192
  %v1198 = vmul.f32 %v1162, %v1197
  %1199 = vrot.lane.b32.xlu0 %v987, 56
  %v1200 = vpop.permute.xlu0 %1199
  %1201 = vrot.lane.b32.xlu0 %v990, 56
  %v1202 = vpop.permute.xlu0 %1201
  %v1206 = vsel %vm169, %v1183, 0
  %v1209 = vsel %vm169, %v1198, 0
  %1211 = vmatpush.msra.mxu0 0.0
  %1212 = vmatpush.msra.mxu0 0.0
  %1213 = vmatpush.msra.mxu0 0.0
  %1214 = vmatpush.msra.mxu0 0.0
  %1215 = vmatpush.msra.mxu0 0.0
  %1216 = vmatpush.msra.mxu0 0.0
  %1217 = vmatpush.msra.mxu0 0.0
  %1218 = vmatpush.msra.mxu0 0.0
  %1219 = vmatpush.msra.mxu0 0.0
  %1220 = vmatpush.msra.mxu0 0.0
  %1221 = vmatpush.msra.mxu0 0.0
  %1222 = vmatpush.msra.mxu0 0.0
  %1223 = vmatpush.msra.mxu0 0.0
  %1224 = vmatpush.msra.mxu0 0.0
  %1225 = vmatpush.msra.mxu0 %v1202
  %1226 = vmatpush.msra.mxu0 %v1200
  %1227 = vmatmul.f32.gmra.mxu0 %v1206
  %v1228 = vpop.f32.mrf.mxu0
  %v1229 = vadd.f32 0.0, %v1228
  %1230 = vmatmul.f32.gmra.mxu0 %v1209
  %v1231 = vpop.f32.mrf.mxu0
  %v1232 = vadd.f32 0.0, %v1231
  %1233 = vdwg.mxu0
  %1234 = vrot.lane.b32.xlu0 %v987, 112
  %v1235 = vpop.permute.xlu0 %1234
  %1236 = vrot.lane.b32.xlu0 %v990, 112
  %v1237 = vpop.permute.xlu0 %1236
  %1238 = vrot.lane.b32.xlu0 %v987, 80
  %v1239 = vpop.permute.xlu0 %1238
  %1240 = vrot.lane.b32.xlu0 %v990, 80
  %v1241 = vpop.permute.xlu0 %1240
  %v1242 = vsel %vm137, %v1235, 0
  %v1244 = vsel %vm137, %v1237, 0
  %v1246 = vsel %vm137, %v1239, 0
  %v1248 = vsel %vm137, %v1241, 0
  %1250 = vmatpush.xpose.msra.mxu0 0.0
  %1251 = vmatpush.xpose.msra.mxu0 0.0
  %1252 = vmatpush.xpose.msra.mxu0 0.0
  %1253 = vmatpush.xpose.msra.mxu0 0.0
  %1254 = vmatpush.xpose.msra.mxu0 0.0
  %1255 = vmatpush.xpose.msra.mxu0 0.0
  %1256 = vmatpush.xpose.msra.mxu0 0.0
  %1257 = vmatpush.xpose.msra.mxu0 0.0
  %1258 = vmatpush.xpose.msra.mxu0 0.0
  %1259 = vmatpush.xpose.msra.mxu0 0.0
  %1260 = vmatpush.xpose.msra.mxu0 0.0
  %1261 = vmatpush.xpose.msra.mxu0 0.0
  %1262 = vmatpush.xpose.msra.mxu0 0.0
  %1263 = vmatpush.xpose.msra.mxu0 0.0
  %1264 = vmatpush.xpose.msra.mxu0 %v1248
  %1265 = vmatpush.xpose.msra.mxu0 %v1246
  %1266 = vmatmul.f32.gmra.mxu0 %v1242
  %v1267 = vpop.f32.mrf.mxu0
  %v1268 = vadd.f32 %v94, %v1267
  %1269 = vmatmul.f32.gmra.mxu0 %v1244
  %v1270 = vpop.f32.mrf.mxu0
  %v1271 = vadd.f32 %v95, %v1270
  %1272 = vdwg.mxu0
  %v1273 = vsel %vm169, %v1268, -inf
  %1274 = vmax.xlane.f32.xlu0 %v1273
  %v1275 = vpop.xlane.xlu0 %1274
  %v1276 = vsel %vm169, %v1271, -inf
  %1277 = vmax.xlane.f32.xlu0 %v1276
  %v1278 = vpop.xlane.xlu0 %1277
  %v1279 = vsub.f32 %v1268, %v1275
  %v1280 = vsub.f32 %v1271, %v1278
  %v1281 = vmul.f32 %v1279, 1.442695
  %v1282 = vpow.pop %v1281
  %v1283 = vmul.f32 %v1280, 1.442695
  %v1284 = vpow.pop %v1283
  %v1285 = vsel %vm169, %v1282, 0.0
  %1286 = vadd.xlane.f32.xlu0 %v1285
  %v1287 = vpop.xlane.xlu0 %1286
  %v1288 = vsel %vm169, %v1284, 0.0
  %1289 = vadd.xlane.f32.xlu0 %v1288
  %v1290 = vpop.xlane.xlu0 %1289
  %v1291 = vrcp.pop %v1287
  %v1292 = vmul.f32 %v1287, %v1291
  %v1293 = vsub.f32 1.0, %v1292
  %v1294 = vmul.f32 %v1291, %v1293
  %v1295 = vadd.f32 %v1291, %v1294
  %vm1296 = vweird.f32 %v1287
  %vm1297 = vweird.f32 %v1291
  %vm1298 = vmor %vm1296, %vm1297
  %v1299 = vsel %vm1298, %v1291, %v1295
  %v1300 = vand.u32 2147483647, %v1287
  %vm1301 = vcmp.eq.f32.partialorder %v1300, 8.507059e+37
  %v1302 = vand.u32 %v1287, 2147483648
  %v1303 = vor.u32 1.1754944e-38, %v1302
  %v1304 = vsel %vm1301, %v1303, %v1299
  %v1305 = vmul.f32 %v1282, %v1304
  %v1306 = vrcp.pop %v1290
  %v1307 = vmul.f32 %v1290, %v1306
  %v1308 = vsub.f32 1.0, %v1307
  %v1309 = vmul.f32 %v1306, %v1308
  %v1310 = vadd.f32 %v1306, %v1309
  %vm1311 = vweird.f32 %v1290
  %vm1312 = vweird.f32 %v1306
  %vm1313 = vmor %vm1311, %vm1312
  %v1314 = vsel %vm1313, %v1306, %v1310
  %v1315 = vand.u32 2147483647, %v1290
  %vm1316 = vcmp.eq.f32.partialorder %v1315, 8.507059e+37
  %v1317 = vand.u32 %v1290, 2147483648
  %v1318 = vor.u32 1.1754944e-38, %v1317
  %v1319 = vsel %vm1316, %v1318, %v1314
  %v1320 = vmul.f32 %v1284, %v1319
  %1321 = vrot.lane.b32.xlu0 %v987, 48
  %v1322 = vpop.permute.xlu0 %1321
  %1323 = vrot.lane.b32.xlu0 %v990, 48
  %v1324 = vpop.permute.xlu0 %1323
  %v1328 = vsel %vm169, %v1305, 0
  %v1331 = vsel %vm169, %v1320, 0
  %1333 = vmatpush.msra.mxu0 0.0
  %1334 = vmatpush.msra.mxu0 0.0
  %1335 = vmatpush.msra.mxu0 0.0
  %1336 = vmatpush.msra.mxu0 0.0
  %1337 = vmatpush.msra.mxu0 0.0
  %1338 = vmatpush.msra.mxu0 0.0
  %1339 = vmatpush.msra.mxu0 0.0
  %1340 = vmatpush.msra.mxu0 0.0
  %1341 = vmatpush.msra.mxu0 0.0
  %1342 = vmatpush.msra.mxu0 0.0
  %1343 = vmatpush.msra.mxu0 0.0
  %1344 = vmatpush.msra.mxu0 0.0
  %1345 = vmatpush.msra.mxu0 0.0
  %1346 = vmatpush.msra.mxu0 0.0
  %1347 = vmatpush.msra.mxu0 %v1324
  %1348 = vmatpush.msra.mxu0 %v1322
  %1349 = vmatmul.f32.gmra.mxu0 %v1328
  %v1350 = vpop.f32.mrf.mxu0
  %v1351 = vadd.f32 0.0, %v1350
  %1352 = vmatmul.f32.gmra.mxu0 %v1331
  %v1353 = vpop.f32.mrf.mxu0
  %v1354 = vadd.f32 0.0, %v1353
  %1355 = vdwg.mxu0
  %1356 = vrot.lane.b32.xlu0 %v987, 104
  %v1357 = vpop.permute.xlu0 %1356
  %1358 = vrot.lane.b32.xlu0 %v990, 104
  %v1359 = vpop.permute.xlu0 %1358
  %1360 = vrot.lane.b32.xlu0 %v987, 72
  %v1361 = vpop.permute.xlu0 %1360
  %1362 = vrot.lane.b32.xlu0 %v990, 72
  %v1363 = vpop.permute.xlu0 %1362
  %v1364 = vsel %vm137, %v1357, 0
  %v1366 = vsel %vm137, %v1359, 0
  %v1368 = vsel %vm137, %v1361, 0
  %v1370 = vsel %vm137, %v1363, 0
  %1372 = vmatpush.xpose.msra.mxu0 0.0
  %1373 = vmatpush.xpose.msra.mxu0 0.0
  %1374 = vmatpush.xpose.msra.mxu0 0.0
  %1375 = vmatpush.xpose.msra.mxu0 0.0
  %1376 = vmatpush.xpose.msra.mxu0 0.0
  %1377 = vmatpush.xpose.msra.mxu0 0.0
  %1378 = vmatpush.xpose.msra.mxu0 0.0
  %1379 = vmatpush.xpose.msra.mxu0 0.0
  %1380 = vmatpush.xpose.msra.mxu0 0.0
  %1381 = vmatpush.xpose.msra.mxu0 0.0
  %1382 = vmatpush.xpose.msra.mxu0 0.0
  %1383 = vmatpush.xpose.msra.mxu0 0.0
  %1384 = vmatpush.xpose.msra.mxu0 0.0
  %1385 = vmatpush.xpose.msra.mxu0 0.0
  %1386 = vmatpush.xpose.msra.mxu0 %v1370
  %1387 = vmatpush.xpose.msra.mxu0 %v1368
  %1388 = vmatmul.f32.gmra.mxu0 %v1364
  %v1389 = vpop.f32.mrf.mxu0
  %v1390 = vadd.f32 %v94, %v1389
  %1391 = vmatmul.f32.gmra.mxu0 %v1366
  %v1392 = vpop.f32.mrf.mxu0
  %v1393 = vadd.f32 %v95, %v1392
  %1394 = vdwg.mxu0
  %v1395 = vsel %vm169, %v1390, -inf
  %1396 = vmax.xlane.f32.xlu0 %v1395
  %v1397 = vpop.xlane.xlu0 %1396
  %v1398 = vsel %vm169, %v1393, -inf
  %1399 = vmax.xlane.f32.xlu0 %v1398
  %v1400 = vpop.xlane.xlu0 %1399
  %v1401 = vsub.f32 %v1390, %v1397
  %v1402 = vsub.f32 %v1393, %v1400
  %v1403 = vmul.f32 %v1401, 1.442695
  %v1404 = vpow.pop %v1403
  %v1405 = vmul.f32 %v1402, 1.442695
  %v1406 = vpow.pop %v1405
  %v1407 = vsel %vm169, %v1404, 0.0
  %1408 = vadd.xlane.f32.xlu0 %v1407
  %v1409 = vpop.xlane.xlu0 %1408
  %v1410 = vsel %vm169, %v1406, 0.0
  %1411 = vadd.xlane.f32.xlu0 %v1410
  %v1412 = vpop.xlane.xlu0 %1411
  %v1413 = vrcp.pop %v1409
  %v1414 = vmul.f32 %v1409, %v1413
  %v1415 = vsub.f32 1.0, %v1414
  %v1416 = vmul.f32 %v1413, %v1415
  %v1417 = vadd.f32 %v1413, %v1416
  %vm1418 = vweird.f32 %v1409
  %vm1419 = vweird.f32 %v1413
  %vm1420 = vmor %vm1418, %vm1419
  %v1421 = vsel %vm1420, %v1413, %v1417
  %v1422 = vand.u32 2147483647, %v1409
  %vm1423 = vcmp.eq.f32.partialorder %v1422, 8.507059e+37
  %v1424 = vand.u32 %v1409, 2147483648
  %v1425 = vor.u32 1.1754944e-38, %v1424
  %v1426 = vsel %vm1423, %v1425, %v1421
  %v1427 = vmul.f32 %v1404, %v1426
  %v1428 = vrcp.pop %v1412
  %v1429 = vmul.f32 %v1412, %v1428
  %v1430 = vsub.f32 1.0, %v1429
  %v1431 = vmul.f32 %v1428, %v1430
  %v1432 = vadd.f32 %v1428, %v1431
  %vm1433 = vweird.f32 %v1412
  %vm1434 = vweird.f32 %v1428
  %vm1435 = vmor %vm1433, %vm1434
  %v1436 = vsel %vm1435, %v1428, %v1432
  %v1437 = vand.u32 2147483647, %v1412
  %vm1438 = vcmp.eq.f32.partialorder %v1437, 8.507059e+37
  %v1439 = vand.u32 %v1412, 2147483648
  %v1440 = vor.u32 1.1754944e-38, %v1439
  %v1441 = vsel %vm1438, %v1440, %v1436
  %v1442 = vmul.f32 %v1406, %v1441
  %1443 = vrot.lane.b32.xlu0 %v987, 40
  %v1444 = vpop.permute.xlu0 %1443
  %1445 = vrot.lane.b32.xlu0 %v990, 40
  %v1446 = vpop.permute.xlu0 %1445
  %v1450 = vsel %vm169, %v1427, 0
  %v1453 = vsel %vm169, %v1442, 0
  %1455 = vmatpush.msra.mxu0 0.0
  %1456 = vmatpush.msra.mxu0 0.0
  %1457 = vmatpush.msra.mxu0 0.0
  %1458 = vmatpush.msra.mxu0 0.0
  %1459 = vmatpush.msra.mxu0 0.0
  %1460 = vmatpush.msra.mxu0 0.0
  %1461 = vmatpush.msra.mxu0 0.0
  %1462 = vmatpush.msra.mxu0 0.0
  %1463 = vmatpush.msra.mxu0 0.0
  %1464 = vmatpush.msra.mxu0 0.0
  %1465 = vmatpush.msra.mxu0 0.0
  %1466 = vmatpush.msra.mxu0 0.0
  %1467 = vmatpush.msra.mxu0 0.0
  %1468 = vmatpush.msra.mxu0 0.0
  %1469 = vmatpush.msra.mxu0 %v1446
  %1470 = vmatpush.msra.mxu0 %v1444
  %1471 = vmatmul.f32.gmra.mxu0 %v1450
  %v1472 = vpop.f32.mrf.mxu0
  %v1473 = vadd.f32 0.0, %v1472
  %1474 = vmatmul.f32.gmra.mxu0 %v1453
  %v1475 = vpop.f32.mrf.mxu0
  %v1476 = vadd.f32 0.0, %v1475
  %1477 = vdwg.mxu0
  %1480 = vrot.lane.b32.xlu0 %v1229, 8
  %v1481 = vpop.permute.xlu0 %1480
  %1482 = vrot.lane.b32.xlu0 %v1232, 8
  %v1483 = vpop.permute.xlu0 %1482
  %1488 = vrot.lane.b32.xlu0 %v1351, 16
  %v1489 = vpop.permute.xlu0 %1488
  %1490 = vrot.lane.b32.xlu0 %v1354, 16
  %v1491 = vpop.permute.xlu0 %1490
  %1496 = vrot.lane.b32.xlu0 %v1473, 24
  %v1497 = vpop.permute.xlu0 %1496
  %1498 = vrot.lane.b32.xlu0 %v1476, 24
  %v1499 = vpop.permute.xlu0 %1498
  %v1502 = vsel %vm137, %v1107, %v1481
  %v1503 = vsel %vm137, %v1110, %v1483
  %v1504 = vsel %vm169, %v1502, %v1489
  %v1505 = vsel %vm169, %v1503, %v1491
  %v1506 = vsel %vm647, %v1504, %v1497
  %v1507 = vsel %vm647, %v1505, %v1499
  %s1508 = scalar_lea.vmem %s4, 32
  %v1509 = vld [vmem:[%s1508] sm:$0xff]
  %v1510 = vld [vmem:[%s1508 + $0x8] sm:$0xff]
  %v1511 = vld [vmem:[%s1508 + $0x10] sm:$0xff]
  %v1512 = vld [vmem:[%s1508 + $0x18] sm:$0xff]
  %v1513 = vld [vmem:[%s2 + $0xd] sm:$0x1]
  %v1514 = vperm.slane %v1513, 0
  %v1516 = vsel %vm36, %v1506, 0
  %v1519 = vsel %vm36, %v1507, 0
  %1521 = vmatpush.msra.mxu0 0.0
  %1522 = vmatpush.msra.mxu0 0.0
  %1523 = vmatpush.msra.mxu0 0.0
  %1524 = vmatpush.msra.mxu0 0.0
  %1525 = vmatpush.msra.mxu0 0.0
  %1526 = vmatpush.msra.mxu0 0.0
  %1527 = vmatpush.msra.mxu0 0.0
  %1528 = vmatpush.msra.mxu0 0.0
  %1529 = vmatpush.msra.mxu0 0.0
  %1530 = vmatpush.msra.mxu0 0.0
  %1531 = vmatpush.msra.mxu0 0.0
  %1532 = vmatpush.msra.mxu0 0.0
  %1533 = vmatpush.msra.mxu0 %v1512
  %1534 = vmatpush.msra.mxu0 %v1511
  %1535 = vmatpush.msra.mxu0 %v1510
  %1536 = vmatpush.msra.mxu0 %v1509
  %1537 = vmatmul.f32.gmra.mxu0 %v1516
  %v1538 = vpop.f32.mrf.mxu0
  %v1539 = vadd.f32 %v1514, %v1538
  %1540 = vmatmul.f32.gmra.mxu0 %v1519
  %v1541 = vpop.f32.mrf.mxu0
  %v1542 = vadd.f32 %v1514, %v1541
  %1543 = vdwg.mxu0
  %v1544 = vadd.f32 %v1539, %v954
  %v1545 = vadd.f32 %v1542, %v955
  %v1546 = vld [vmem:[%s2 + $0xe] sm:$0x1]
  %v1547 = vld [vmem:[%s2 + $0xf] sm:$0x1]
  %v1548 = vsel %vm36, %v1544, 0.0
  %1549 = vadd.xlane.f32.xlu0 %v1548
  %v1550 = vpop.xlane.xlu0 %1549
  %v1551 = vsel %vm36, %v1545, 0.0
  %1552 = vadd.xlane.f32.xlu0 %v1551
  %v1553 = vpop.xlane.xlu0 %1552
  %v1554 = vmul.f32 %v1550, %v49
  %v1555 = vmul.f32 %v1553, %v49
  %v1556 = vsub.f32 %v1544, %v1554
  %v1557 = vsub.f32 %v1545, %v1555
  %v1558 = vmul.f32 %v1556, %v1556
  %v1559 = vmul.f32 %v1557, %v1557
  %v1560 = vsel %vm36, %v1558, 0.0
  %1561 = vadd.xlane.f32.xlu0 %v1560
  %v1562 = vpop.xlane.xlu0 %1561
  %v1563 = vsel %vm36, %v1559, 0.0
  %1564 = vadd.xlane.f32.xlu0 %v1563
  %v1565 = vpop.xlane.xlu0 %1564
  %v1566 = vmul.f32 %v1562, %v49
  %v1567 = vmul.f32 %v1565, %v49
  %v1568 = vadd.f32 %v1566, 1e-12
  %v1569 = vadd.f32 %v1567, 1e-12
  %v1570 = vrsqrt.pop %v1568
  %v1571 = vmul.f32 %v1570, %v1568
  %v1572 = vmul.f32 %v1571, %v1570
  %v1573 = vmul.f32 0.5, %v1572
  %v1574 = vsub.f32 1.5, %v1573
  %v1575 = vmul.f32 %v1570, %v1574
  %vm1576 = vweird.f32 %v1568
  %vm1577 = vweird.f32 %v1570
  %vm1578 = vmor %vm1576, %vm1577
  %v1579 = vsel %vm1578, %v1570, %v1575
  %v1580 = vrsqrt.pop %v1569
  %v1581 = vmul.f32 %v1580, %v1569
  %v1582 = vmul.f32 %v1581, %v1580
  %v1583 = vmul.f32 0.5, %v1582
  %v1584 = vsub.f32 1.5, %v1583
  %v1585 = vmul.f32 %v1580, %v1584
  %vm1586 = vweird.f32 %v1569
  %vm1587 = vweird.f32 %v1580
  %vm1588 = vmor %vm1586, %vm1587
  %v1589 = vsel %vm1588, %v1580, %v1585
  %v1590 = vmul.f32 %v1556, %v1579
  %v1591 = vmul.f32 %v1557, %v1589
  %v1592 = vperm.slane %v1546, 0
  %v1593 = vmul.f32 %v1590, %v1592
  %v1594 = vmul.f32 %v1591, %v1592
  %v1595 = vperm.slane %v1547, 0
  %v1596 = vadd.f32 %v1593, %v1595
  %v1597 = vadd.f32 %v1594, %v1595
  %s1598 = scalar_lea.vmem %s5, 32
  %v1599 = vld [vmem:[%s1598] sm:$0xff]
  %v1600 = vld [vmem:[%s1598 + $0x8] sm:$0xff]
  %v1601 = vld [vmem:[%s1598 + $0x10] sm:$0xff]
  %v1602 = vld [vmem:[%s1598 + $0x18] sm:$0xff]
  %v1603 = vld [vmem:[%s2 + $0x10] sm:$0x1]
  %v1604 = vperm.slane %v1603, 0
  %v1606 = vsel %vm36, %v1596, 0
  %v1609 = vsel %vm36, %v1597, 0
  %1611 = vmatpush.msra.mxu0 0.0
  %1612 = vmatpush.msra.mxu0 0.0
  %1613 = vmatpush.msra.mxu0 0.0
  %1614 = vmatpush.msra.mxu0 0.0
  %1615 = vmatpush.msra.mxu0 0.0
  %1616 = vmatpush.msra.mxu0 0.0
  %1617 = vmatpush.msra.mxu0 0.0
  %1618 = vmatpush.msra.mxu0 0.0
  %1619 = vmatpush.msra.mxu0 0.0
  %1620 = vmatpush.msra.mxu0 0.0
  %1621 = vmatpush.msra.mxu0 0.0
  %1622 = vmatpush.msra.mxu0 0.0
  %1623 = vmatpush.msra.mxu0 %v1602
  %1624 = vmatpush.msra.mxu0 %v1601
  %1625 = vmatpush.msra.mxu0 %v1600
  %1626 = vmatpush.msra.mxu0 %v1599
  %1627 = vmatmul.f32.gmra.mxu0 %v1606
  %v1628 = vpop.f32.mrf.mxu0
  %v1629 = vadd.f32 %v1604, %v1628
  %1630 = vmatmul.f32.gmra.mxu0 %v1609
  %v1631 = vpop.f32.mrf.mxu0
  %v1632 = vadd.f32 %v1604, %v1631
  %1633 = vdwg.mxu0
  %v1634 = vmul.f32 %v1629, 0.5
  %v1635 = vmul.f32 %v1632, 0.5
  %v1636 = vmul.f32 %v1629, 0.70710677
  %v1637 = vmul.f32 %v1632, 0.70710677
  %v1638 = vmul.f32 %v1636, %v1636
  %v1639 = vmin.f32 16.0, %v1638
  %v1640 = vmul.f32 %v1639, 2.1237322e-06
  %v1641 = vadd.f32 %v1640, 0.00028619796
  %v1642 = vmul.f32 %v1639, %v1641
  %v1643 = vadd.f32 %v1642, 0.0036580483
  %v1644 = vmul.f32 %v1639, %v1643
  %v1645 = vadd.f32 %v1644, 0.05243302
  %v1646 = vmul.f32 %v1639, %v1645
  %v1647 = vadd.f32 %v1646, 0.18741608
  %v1648 = vmul.f32 %v1639, %v1647
  %v1649 = vadd.f32 %v1648, 1.1283791
  %v1650 = vmul.f32 %v1636, %v1649
  %v1651 = vmul.f32 %v1639, 3.8918573e-05
  %v1652 = vadd.f32 %v1651, 0.001143296
  %v1653 = vmul.f32 %v1639, %v1652
  %v1654 = vadd.f32 %v1653, 0.014752088
  %v1655 = vmul.f32 %v1639, %v1654
  %v1656 = vadd.f32 %v1655, 0.112945676
  %v1657 = vmul.f32 %v1639, %v1656
  %v1658 = vadd.f32 %v1657, 0.4994258
  %v1659 = vmul.f32 %v1639, %v1658
  %v1660 = vadd.f32 %v1659, 1.0
  %v1661 = vrcp.pop %v1660
  %v1662 = vmul.f32 %v1660, %v1661
  %v1663 = vsub.f32 1.0, %v1662
  %v1664 = vmul.f32 %v1661, %v1663
  %v1665 = vadd.f32 %v1661, %v1664
  %vm1666 = vweird.f32 %v1660
  %vm1667 = vweird.f32 %v1661
  %vm1668 = vmor %vm1666, %vm1667
  %v1669 = vsel %vm1668, %v1661, %v1665
  %v1670 = vand.u32 2147483647, %v1660
  %vm1671 = vcmp.eq.f32.partialorder %v1670, 8.507059e+37
  %v1672 = vand.u32 %v1660, 2147483648
  %v1673 = vor.u32 1.1754944e-38, %v1672
  %v1674 = vsel %vm1671, %v1673, %v1669
  %v1675 = vmul.f32 %v1650, %v1674
  %v1676 = vmin.f32 %v1675, 1.0
  %v1677 = vmax.f32 %v1676, -1.0
  %v1678 = vmul.f32 %v1637, %v1637
  %v1679 = vmin.f32 16.0, %v1678
  %v1680 = vmul.f32 %v1679, 2.1237322e-06
  %v1681 = vadd.f32 %v1680, 0.00028619796
  %v1682 = vmul.f32 %v1679, %v1681
  %v1683 = vadd.f32 %v1682, 0.0036580483
  %v1684 = vmul.f32 %v1679, %v1683
  %v1685 = vadd.f32 %v1684, 0.05243302
  %v1686 = vmul.f32 %v1679, %v1685
  %v1687 = vadd.f32 %v1686, 0.18741608
  %v1688 = vmul.f32 %v1679, %v1687
  %v1689 = vadd.f32 %v1688, 1.1283791
  %v1690 = vmul.f32 %v1637, %v1689
  %v1691 = vmul.f32 %v1679, 3.8918573e-05
  %v1692 = vadd.f32 %v1691, 0.001143296
  %v1693 = vmul.f32 %v1679, %v1692
  %v1694 = vadd.f32 %v1693, 0.014752088
  %v1695 = vmul.f32 %v1679, %v1694
  %v1696 = vadd.f32 %v1695, 0.112945676
  %v1697 = vmul.f32 %v1679, %v1696
  %v1698 = vadd.f32 %v1697, 0.4994258
  %v1699 = vmul.f32 %v1679, %v1698
  %v1700 = vadd.f32 %v1699, 1.0
  %v1701 = vrcp.pop %v1700
  %v1702 = vmul.f32 %v1700, %v1701
  %v1703 = vsub.f32 1.0, %v1702
  %v1704 = vmul.f32 %v1701, %v1703
  %v1705 = vadd.f32 %v1701, %v1704
  %vm1706 = vweird.f32 %v1700
  %vm1707 = vweird.f32 %v1701
  %vm1708 = vmor %vm1706, %vm1707
  %v1709 = vsel %vm1708, %v1701, %v1705
  %v1710 = vand.u32 2147483647, %v1700
  %vm1711 = vcmp.eq.f32.partialorder %v1710, 8.507059e+37
  %v1712 = vand.u32 %v1700, 2147483648
  %v1713 = vor.u32 1.1754944e-38, %v1712
  %v1714 = vsel %vm1711, %v1713, %v1709
  %v1715 = vmul.f32 %v1690, %v1714
  %v1716 = vmin.f32 %v1715, 1.0
  %v1717 = vmax.f32 %v1716, -1.0
  %v1718 = vadd.f32 %v1677, 1.0
  %v1719 = vadd.f32 %v1717, 1.0
  %v1720 = vmul.f32 %v1634, %v1718
  %v1721 = vmul.f32 %v1635, %v1719
  %s1722 = scalar_lea.vmem %s6, 64
  %v1723 = vld [vmem:[%s1722] sm:$0xff]
  %v1724 = vld [vmem:[%s1722 + $0x8] sm:$0xff]
  %v1725 = vld [vmem:[%s1722 + $0x10] sm:$0xff]
  %v1726 = vld [vmem:[%s1722 + $0x18] sm:$0xff]
  %v1727 = vld [vmem:[%s1722 + $0x20] sm:$0xff]
  %v1728 = vld [vmem:[%s1722 + $0x28] sm:$0xff]
  %v1729 = vld [vmem:[%s1722 + $0x30] sm:$0xff]
  %v1730 = vld [vmem:[%s1722 + $0x38] sm:$0xff]
  %v1731 = vld [vmem:[%s2 + $0x11] sm:$0x1]
  %v1732 = vperm.slane %v1731, 0
  %v1734 = vsel %vm872, %v1720, 0
  %v1737 = vsel %vm872, %v1721, 0
  %1739 = vmatpush.msra.mxu0 0.0
  %1740 = vmatpush.msra.mxu0 0.0
  %1741 = vmatpush.msra.mxu0 0.0
  %1742 = vmatpush.msra.mxu0 0.0
  %1743 = vmatpush.msra.mxu0 0.0
  %1744 = vmatpush.msra.mxu0 0.0
  %1745 = vmatpush.msra.mxu0 0.0
  %1746 = vmatpush.msra.mxu0 0.0
  %1747 = vmatpush.msra.mxu0 %v1730
  %1748 = vmatpush.msra.mxu0 %v1729
  %1749 = vmatpush.msra.mxu0 %v1728
  %1750 = vmatpush.msra.mxu0 %v1727
  %1751 = vmatpush.msra.mxu0 %v1726
  %1752 = vmatpush.msra.mxu0 %v1725
  %1753 = vmatpush.msra.mxu0 %v1724
  %1754 = vmatpush.msra.mxu0 %v1723
  %1755 = vmatmul.f32.gmra.mxu0 %v1734
  %v1756 = vpop.f32.mrf.mxu0
  %v1757 = vadd.f32 %v1732, %v1756
  %1758 = vmatmul.f32.gmra.mxu0 %v1737
  %v1759 = vpop.f32.mrf.mxu0
  %v1760 = vadd.f32 %v1732, %v1759
  %1761 = vdwg.mxu0
  %v1762 = vadd.f32 %v1757, %v1596
  %v1763 = vadd.f32 %v1760, %v1597
  %v1764 = vld [vmem:[%s2 + $0x12] sm:$0x1]
  %v1765 = vld [vmem:[%s2 + $0x13] sm:$0x1]
  %v1766 = vsel %vm36, %v1762, 0.0
  %1767 = vadd.xlane.f32.xlu0 %v1766
  %v1768 = vpop.xlane.xlu0 %1767
  %v1769 = vsel %vm36, %v1763, 0.0
  %1770 = vadd.xlane.f32.xlu0 %v1769
  %v1771 = vpop.xlane.xlu0 %1770
  %v1772 = vmul.f32 %v1768, %v49
  %v1773 = vmul.f32 %v1771, %v49
  %v1774 = vsub.f32 %v1762, %v1772
  %v1775 = vsub.f32 %v1763, %v1773
  %v1776 = vmul.f32 %v1774, %v1774
  %v1777 = vmul.f32 %v1775, %v1775
  %v1778 = vsel %vm36, %v1776, 0.0
  %1779 = vadd.xlane.f32.xlu0 %v1778
  %v1780 = vpop.xlane.xlu0 %1779
  %v1781 = vsel %vm36, %v1777, 0.0
  %1782 = vadd.xlane.f32.xlu0 %v1781
  %v1783 = vpop.xlane.xlu0 %1782
  %v1784 = vmul.f32 %v1780, %v49
  %v1785 = vmul.f32 %v1783, %v49
  %v1786 = vadd.f32 %v1784, 1e-12
  %v1787 = vadd.f32 %v1785, 1e-12
  %v1788 = vrsqrt.pop %v1786
  %v1789 = vmul.f32 %v1788, %v1786
  %v1790 = vmul.f32 %v1789, %v1788
  %v1791 = vmul.f32 0.5, %v1790
  %v1792 = vsub.f32 1.5, %v1791
  %v1793 = vmul.f32 %v1788, %v1792
  %vm1794 = vweird.f32 %v1786
  %vm1795 = vweird.f32 %v1788
  %vm1796 = vmor %vm1794, %vm1795
  %v1797 = vsel %vm1796, %v1788, %v1793
  %v1798 = vrsqrt.pop %v1787
  %v1799 = vmul.f32 %v1798, %v1787
  %v1800 = vmul.f32 %v1799, %v1798
  %v1801 = vmul.f32 0.5, %v1800
  %v1802 = vsub.f32 1.5, %v1801
  %v1803 = vmul.f32 %v1798, %v1802
  %vm1804 = vweird.f32 %v1787
  %vm1805 = vweird.f32 %v1798
  %vm1806 = vmor %vm1804, %vm1805
  %v1807 = vsel %vm1806, %v1798, %v1803
  %v1808 = vmul.f32 %v1774, %v1797
  %v1809 = vmul.f32 %v1775, %v1807
  %v1810 = vperm.slane %v1764, 0
  %v1811 = vmul.f32 %v1808, %v1810
  %v1812 = vmul.f32 %v1809, %v1810
  %v1813 = vperm.slane %v1765, 0
  %v1814 = vadd.f32 %v1811, %v1813
  %v1815 = vadd.f32 %v1812, %v1813
  %v1817 = vrot.slane %v1815, 7
  %vm1819 = vcmask 1040384
  %v1820 = vsel %vm1819, %v1814, %v1817
  %v1821 = vld [vmem:[%s7] sm:$0xff]
  %v1822 = vld [vmem:[%s7 + $0x8] sm:$0xff]
  %v1823 = vld [vmem:[%s7 + $0x10] sm:$0xff]
  %v1824 = vld [vmem:[%s7 + $0x18] sm:$0xff]
  %v1825 = vld [vmem:[%s2 + $0x2] sm:$0x1]
  %v1826 = vperm.slane %v1825, 0
  %v1828 = vsel %vm36, %v1820, 0
  %1830 = vmatpush.msra.mxu0 0.0
  %1831 = vmatpush.msra.mxu0 0.0
  %1832 = vmatpush.msra.mxu0 0.0
  %1833 = vmatpush.msra.mxu0 0.0
  %1834 = vmatpush.msra.mxu0 0.0
  %1835 = vmatpush.msra.mxu0 0.0
  %1836 = vmatpush.msra.mxu0 0.0
  %1837 = vmatpush.msra.mxu0 0.0
  %1838 = vmatpush.msra.mxu0 0.0
  %1839 = vmatpush.msra.mxu0 0.0
  %1840 = vmatpush.msra.mxu0 0.0
  %1841 = vmatpush.msra.mxu0 0.0
  %1842 = vmatpush.msra.mxu0 %v1824
  %1843 = vmatpush.msra.mxu0 %v1823
  %1844 = vmatpush.msra.mxu0 %v1822
  %1845 = vmatpush.msra.mxu0 %v1821
  %1846 = vmatmul.f32.gmra.mxu0 %v1828
  %v1847 = vpop.f32.mrf.mxu0
  %v1848 = vadd.f32 %v1826, %v1847
  %1849 = vdwg.mxu0
  %v1850 = vtanh.pop %v1848
  %v1851 = vld [vmem:[%s8] sm:$0xff]
  %v1852 = vld [vmem:[%s8 + $0x8] sm:$0xff]
  %v1853 = vld [vmem:[%s8 + $0x10] sm:$0xff]
  %v1854 = vld [vmem:[%s8 + $0x18] sm:$0xff]
  %v1855 = vld [vmem:[%s8 + $0x20] sm:$0xff]
  %v1856 = vld [vmem:[%s8 + $0x28] sm:$0xff]
  %v1857 = vld [vmem:[%s8 + $0x30] sm:$0xff]
  %v1858 = vld [vmem:[%s8 + $0x38] sm:$0xff]
  %v1859 = vld [vmem:[%s8 + $0x40] sm:$0xff]
  %v1860 = vld [vmem:[%s8 + $0x48] sm:$0xff]
  %v1861 = vld [vmem:[%s8 + $0x50] sm:$0xff]
  %v1862 = vld [vmem:[%s8 + $0x58] sm:$0xff]
  %v1863 = vld [vmem:[%s8 + $0x60] sm:$0xff]
  %v1864 = vld [vmem:[%s8 + $0x68] sm:$0xff]
  %v1865 = vld [vmem:[%s8 + $0x70] sm:$0xff]
  %v1866 = vld [vmem:[%s8 + $0x78] sm:$0xff]
  %v1867 = vld [vmem:[%s2 + $0x3] sm:$0x1]
  %v1868 = vperm.slane %v1867, 0
  %1869 = vmatpush.msra.mxu0 %v1866
  %1870 = vmatpush.msra.mxu0 %v1865
  %1871 = vmatpush.msra.mxu0 %v1864
  %1872 = vmatpush.msra.mxu0 %v1863
  %1873 = vmatpush.msra.mxu0 %v1862
  %1874 = vmatpush.msra.mxu0 %v1861
  %1875 = vmatpush.msra.mxu0 %v1860
  %1876 = vmatpush.msra.mxu0 %v1859
  %1877 = vmatpush.msra.mxu0 %v1858
  %1878 = vmatpush.msra.mxu0 %v1857
  %1879 = vmatpush.msra.mxu0 %v1856
  %1880 = vmatpush.msra.mxu0 %v1855
  %1881 = vmatpush.msra.mxu0 %v1854
  %1882 = vmatpush.msra.mxu0 %v1853
  %1883 = vmatpush.msra.mxu0 %v1852
  %1884 = vmatpush.msra.mxu0 %v1851
  %1885 = vmatmul.f32.gmra.mxu0 %v1850
  %v1886 = vpop.f32.mrf.mxu0
  %v1887 = vadd.f32 %v1868, %v1886
  %1888 = vdwg.mxu0
  %v1889 = vmul.f32 %v1850, %v1850
  %vm1890 = vcmask 1041408
  %v1891 = vsel %vm1890, %v1889, 0.0
  %1892 = vadd.xlane.f32.xlu0 %v1891
  %v1893 = vpop.xlane.xlu0 %1892
  %v1894 = vmax.f32 %v1893, 1e-24
  %v1895 = vrsqrt.pop %v1894
  %v1896 = vmul.f32 %v1895, %v1894
  %v1897 = vmul.f32 %v1896, %v1895
  %v1898 = vmul.f32 0.5, %v1897
  %v1899 = vsub.f32 1.5, %v1898
  %v1900 = vmul.f32 %v1895, %v1899
  %vm1901 = vweird.f32 %v1894
  %vm1902 = vweird.f32 %v1895
  %vm1903 = vmor %vm1901, %vm1902
  %v1904 = vsel %vm1903, %v1895, %v1900
  %v1905 = vmul.f32 %v1850, %v1904
  %1906 = vst [vmem:[%s9] sm:$0x3] %v1887
  %1907 = vst [vmem:[%s9 + $0x2] sm:$0x3] %v1905
  // Predicated region
  $region38: #{net_forward.1} parent=0 // pred_check
    _
  $region39: #{net_forward.1} parent=0 // pred_check_branch
    %1909 = sbr.rel (0) target = $region41
  $region40: #{net_forward.1} parent=0 // pred_region
    _
  $region41: #{net_forward.1} parent=0 // pred_fallthru
    _
  // Predicated region
  $region42: #{net_forward.1} parent=0 // pred_check
    _
  $region43: #{net_forward.1} parent=0 // pred_check_branch
    %1911 = sbr.rel (0) target = $region45
  $region44: #{net_forward.1} parent=0 // pred_region
    _
  $region45: #{net_forward.1} parent=0 // pred_fallthru
    _

</llo_original>
